<compile_context>
chip_gen: v7x
topology: tpu7x:2x2x1
jax: 0.10.0
libtpu: 0.0.40
codegen_flags: <defaults>
</compile_context>

<pallas_src>
import functools

import jax
import jax.numpy as jnp
from jax.experimental import pallas as pl
from jax.experimental.pallas import tpu as pltpu


def _mhsa_kernel(x_ref, wqkv_ref, wfc_ref, bfc_ref, o_ref, *, embed_size, heads):
    """One grid step == `batch_block` batch elements.

    x_ref    : (Bt, S, E)     bf16 input block
    wqkv_ref : (E, 3*H*E)     bf16 fused QKV weights (x @ wqkv gives all Q/K/V)
    wfc_ref  : (E, E)         bf16 fc weight (already transposed)
    bfc_ref  : (1, E)         f32 fc bias
    o_ref    : (Bt, S, E)     output block (original dtype)
    """
    Bt, S, E = x_ref.shape

    # Fused QKV projection for all heads: one wide MXU matmul (bf16 -> f32 acc).
    x2d = x_ref[...].reshape(Bt * S, E)                      # free (last dim kept)
    qkv = jnp.dot(x2d, wqkv_ref[...], preferred_element_type=jnp.float32)
    qkv = qkv.reshape(Bt, S, 3 * heads * E)                  # free (last dim kept)

    inv_scale = 1.0 / (embed_size ** 0.5)
    acc = jnp.zeros((Bt, S, E), jnp.float32)
    for h in range(heads):                                   # static tiny loop (3)
        base = 3 * h * E
        q = (qkv[:, :, base:base + E] * inv_scale).astype(jnp.bfloat16)
        k = qkv[:, :, base + E:base + 2 * E].astype(jnp.bfloat16)
        v = qkv[:, :, base + 2 * E:base + 3 * E].astype(jnp.bfloat16)

        # Scores: contract last dims directly (no materialized k.T / XLU work).
        s = jnp.einsum("bqd,bkd->bqk", q, k,
                       preferred_element_type=jnp.float32)   # (Bt, S_q, S_k)

        # torch.softmax(scores, dim=1): normalize over the *query* axis.
        m = jnp.max(s, axis=1, keepdims=True)
        e = jnp.exp(s - m)
        w = e * pl.reciprocal(jnp.sum(e, axis=1, keepdims=True), approx=True)

        acc += jnp.einsum("bqk,bkd->bqd", w.astype(jnp.bfloat16), v,
                          preferred_element_type=jnp.float32)

    # Mean over heads, then fc (bf16 matmul, f32 accumulate, f32 bias).
    accm = (acc * (1.0 / heads)).reshape(Bt * S, E)          # free (last dim kept)
    out = jnp.dot(accm.astype(jnp.bfloat16), wfc_ref[...],
                  preferred_element_type=jnp.float32) + bfc_ref[...]
    o_ref[...] = out.reshape(Bt, S, E).astype(o_ref.dtype)


def multi_head_self_attention(x, wq, wk, wv, wfc, bfc, *, heads=3, batch_block=None):
    """x: (B, S, E).  wq/wk/wv: (heads, E, E) PyTorch-layout weights (out, in).
    wfc: (E, E) PyTorch-layout, bfc: (E,)."""
    B, S, E = x.shape
    assert wq.shape == (heads, E, E)
    out_dtype = x.dtype

    if batch_block is None:
        # Largest divisor of B that still leaves >= 2 grid steps (v7x has 2 TCs);
        # merging batches into one block amortizes the ~0.35 us/step overhead.
        batch_block = 1
        for cand in range(B // 2, 0, -1):
            if B % cand == 0:
                batch_block = cand
                break
    assert B % batch_block == 0
    grid = (B // batch_block,)

    # Weight prep (one-time, wrapper side): transpose PyTorch (out, in) -> (in, out),
    # fuse all Q/K/V heads into one (E, 3*H*E) matrix, cast matmul operands to bf16.
    wq_t = jnp.transpose(wq, (0, 2, 1))                      # (H, E, E)
    wk_t = jnp.transpose(wk, (0, 2, 1))
    wv_t = jnp.transpose(wv, (0, 2, 1))
    w_qkv = jnp.stack([wq_t, wk_t, wv_t], axis=1)            # (H, 3, E_in, E_out)
    w_qkv = jnp.transpose(w_qkv, (2, 0, 1, 3)).reshape(E, 3 * heads * E)
    w_qkv = w_qkv.astype(jnp.bfloat16)
    wfc_t = wfc.T.astype(jnp.bfloat16)
    bfc_2d = bfc.reshape(1, E).astype(jnp.float32)
    x_bf = x.astype(jnp.bfloat16)

    kernel = functools.partial(_mhsa_kernel, embed_size=E, heads=heads)
    he3 = 3 * heads * E

    return pl.pallas_call(
        kernel,
        out_shape=jax.ShapeDtypeStruct((B, S, E), out_dtype),
        grid_spec=pltpu.PrefetchScalarGridSpec(
            num_scalar_prefetch=0,
            grid=grid,
            in_specs=[
                pl.BlockSpec((batch_block, S, E), lambda b: (b, 0, 0)),  # x
                pl.BlockSpec((E, he3), lambda b: (0, 0)),                # fused QKV w
                pl.BlockSpec((E, E), lambda b: (0, 0)),                  # fc w
                pl.BlockSpec((1, E), lambda b: (0, 0)),                  # fc bias
            ],
            out_specs=pl.BlockSpec((batch_block, S, E), lambda b: (b, 0, 0)),
        ),
        compiler_params=pltpu.CompilerParams(
            dimension_semantics=("parallel",),
            # Comfortable headroom under v7x's 64 MiB physical VMEM.
            # TODO(synk): at realistic ViT sizes (E=768, H=12) also tile the E
            # contraction into the grid instead of keeping all weights resident.
            vmem_limit_bytes=48 * 1024 * 1024,
        ),
    )(x_bf, w_qkv, wfc_t, bfc_2d)


def _reference(x, wq, wk, wv, wfc, bfc, heads=3):
    """Pure-JAX (f32) reference matching the PyTorch module exactly."""
    E = x.shape[-1]
    acc = 0.0
    for h in range(heads):
        Q = x @ wq[h].T
        K = x @ wk[h].T
        V = x @ wv[h].T
        s = (Q @ jnp.swapaxes(K, -1, -2)) / (E ** 0.5)
        w = jax.nn.softmax(s, axis=1)          # dim=1, as in the PyTorch code
        acc = acc + w @ V
    acc = acc / heads
    return acc @ wfc.T + bfc


if __name__ == "__main__":
    # embed_size = 256 as in the module; small batch / sequence.
    B, S, E, H = 2, 8, 256, 3

    key = jax.random.PRNGKey(0)
    kx, kq, kk, kv, kw, kb = jax.random.split(key, 6)

    bound = 1.0 / (E ** 0.5)  # PyTorch nn.Linear default init range
    x = jax.random.normal(kx, (B, S, E), dtype=jnp.float32)
    wq = jax.random.uniform(kq, (H, E, E), minval=-bound, maxval=bound, dtype=jnp.float32)
    wk = jax.random.uniform(kk, (H, E, E), minval=-bound, maxval=bound, dtype=jnp.float32)
    wv = jax.random.uniform(kv, (H, E, E), minval=-bound, maxval=bound, dtype=jnp.float32)
    wfc = jax.random.uniform(kw, (E, E), minval=-bound, maxval=bound, dtype=jnp.float32)
    bfc = jax.random.uniform(kb, (E,), minval=-bound, maxval=bound, dtype=jnp.float32)

    out = multi_head_self_attention(x, wq, wk, wv, wfc, bfc, heads=H)
    out = jax.block_until_ready(out)

    ref = _reference(x, wq, wk, wv, wfc, bfc, heads=H)
    assert out.shape == (B, S, E)
    # bf16 MXU path + approx reciprocal -> looser tolerance than the f32 reference.
    assert jnp.allclose(out, ref, atol=2e-2, rtol=2e-2), "mismatch vs reference"

    print("KERNEL_OK")
</pallas_src>

<mosaic_0001>
module attributes {stable_mosaic.version = 11 : i64} {
  func.func @_mhsa_kernel(%arg0: i32, %arg1: memref<1x8x256xbf16, #tpu.memory_space<vmem>>, %arg2: memref<256x2304xbf16, #tpu.memory_space<vmem>>, %arg3: memref<256x256xbf16, #tpu.memory_space<vmem>>, %arg4: memref<1x256xf32, #tpu.memory_space<vmem>>, %arg5: memref<1x8x256xf32, #tpu.memory_space<vmem>>) attributes {dimension_semantics = [#tpu.dimension_semantics<parallel>], iteration_bounds = array<i64: 2>, scalar_prefetch = 0 : i64, scratch_operands = 0 : i64, tpu.core_type = #tpu.core_type<tc>, window_params = [{transform_indices = @transform_0, window_bounds = array<i64: 1, 8, 256>}, {pipeline_mode = #tpu.pipeline_mode<synchronous>, transform_indices = @transform_1, window_bounds = array<i64: 256, 2304>}, {pipeline_mode = #tpu.pipeline_mode<synchronous>, transform_indices = @transform_2, window_bounds = array<i64: 256, 256>}, {pipeline_mode = #tpu.pipeline_mode<synchronous>, transform_indices = @transform_3, window_bounds = array<i64: 1, 256>}, {transform_indices = @transform_4, window_bounds = array<i64: 1, 8, 256>}]} {
    %c0 = arith.constant 0 : index
    %c0_0 = arith.constant 0 : index
    %c0_1 = arith.constant 0 : index
    %0 = vector.load %arg1[%c0, %c0_0, %c0_1] : memref<1x8x256xbf16, #tpu.memory_space<vmem>>, vector<1x8x256xbf16>
    %1 = vector.shape_cast %0 : vector<1x8x256xbf16> to vector<8x256xbf16>
    %c0_2 = arith.constant 0 : index
    %c0_3 = arith.constant 0 : index
    %2 = vector.load %arg2[%c0_2, %c0_3] : memref<256x2304xbf16, #tpu.memory_space<vmem>>, vector<256x2304xbf16>
    %cst = arith.constant dense<0.000000e+00> : vector<8x2304xf32>
    %3 = tpu.matmul %1, %2, %cst {dimension_numbers = #tpu.dot_dimension_numbers<[1], [0], [0], [1], [0, 0, 1, 1], [], []>} : vector<8x256xbf16>, vector<256x2304xbf16>, vector<8x2304xf32> -> vector<8x2304xf32>
    %4 = vector.shape_cast %3 : vector<8x2304xf32> to vector<1x8x2304xf32>
    %cst_4 = arith.constant 0.000000e+00 : f32
    %5 = vector.broadcast %cst_4 : f32 to vector<1x8x256xf32>
    %6 = vector.extract_strided_slice %4 {offsets = [0, 0, 0], sizes = [1, 8, 256], strides = [1, 1, 1]} : vector<1x8x2304xf32> to vector<1x8x256xf32>
    %cst_5 = arith.constant 6.250000e-02 : f32
    %7 = vector.broadcast %cst_5 : f32 to vector<1x8x256xf32>
    %8 = arith.mulf %6, %7 : vector<1x8x256xf32>
    %9 = arith.truncf %8 : vector<1x8x256xf32> to vector<1x8x256xbf16>
    %10 = vector.extract_strided_slice %4 {offsets = [0, 0, 256], sizes = [1, 8, 256], strides = [1, 1, 1]} : vector<1x8x2304xf32> to vector<1x8x256xf32>
    %11 = arith.truncf %10 : vector<1x8x256xf32> to vector<1x8x256xbf16>
    %12 = vector.extract_strided_slice %4 {offsets = [0, 0, 512], sizes = [1, 8, 256], strides = [1, 1, 1]} : vector<1x8x2304xf32> to vector<1x8x256xf32>
    %13 = arith.truncf %12 : vector<1x8x256xf32> to vector<1x8x256xbf16>
    "tpu.trace_start"() <{level = 10 : i32, message = "bqd,bkd->bqk"}> : () -> ()
    %cst_6 = arith.constant dense<0.000000e+00> : vector<1x8x8xf32>
    %14 = tpu.matmul %9, %11, %cst_6 {dimension_numbers = #tpu.dot_dimension_numbers<[2], [2], [1], [1], [0, 0, 0, 1, 1, 1], [0], [0]>} : vector<1x8x256xbf16>, vector<1x8x256xbf16>, vector<1x8x8xf32> -> vector<1x8x8xf32>
    "tpu.trace_stop"() : () -> ()
    %cst_7 = arith.constant dense<0xFF800000> : vector<1x8xf32>
    %15 = vector.multi_reduction <maximumf>, %14, %cst_7 [1] : vector<1x8x8xf32> to vector<1x8xf32>
    %16 = vector.shape_cast %15 : vector<1x8xf32> to vector<1x1x8xf32>
    %17 = vector.broadcast %16 : vector<1x1x8xf32> to vector<1x8x8xf32>
    %18 = arith.subf %14, %17 : vector<1x8x8xf32>
    %19 = math.exp %18 : vector<1x8x8xf32>
    %cst_8 = arith.constant dense<0.000000e+00> : vector<1x8xf32>
    %20 = vector.multi_reduction <add>, %19, %cst_8 [1] : vector<1x8x8xf32> to vector<1x8xf32>
    %21 = vector.shape_cast %20 : vector<1x8xf32> to vector<1x1x8xf32>
    %22 = tpu.reciprocal %21 {approx = true} : vector<1x1x8xf32> -> vector<1x1x8xf32>
    %23 = vector.broadcast %22 : vector<1x1x8xf32> to vector<1x8x8xf32>
    %24 = arith.mulf %19, %23 : vector<1x8x8xf32>
    %25 = arith.truncf %24 : vector<1x8x8xf32> to vector<1x8x8xbf16>
    "tpu.trace_start"() <{level = 10 : i32, message = "bqk,bkd->bqd"}> : () -> ()
    %cst_9 = arith.constant dense<0.000000e+00> : vector<1x8x256xf32>
    %26 = tpu.matmul %25, %13, %cst_9 {dimension_numbers = #tpu.dot_dimension_numbers<[2], [1], [1], [2], [0, 0, 0, 1, 1, 2], [0], [0]>} : vector<1x8x8xbf16>, vector<1x8x256xbf16>, vector<1x8x256xf32> -> vector<1x8x256xf32>
    "tpu.trace_stop"() : () -> ()
    %27 = arith.addf %5, %26 : vector<1x8x256xf32>
    %28 = vector.extract_strided_slice %4 {offsets = [0, 0, 768], sizes = [1, 8, 256], strides = [1, 1, 1]} : vector<1x8x2304xf32> to vector<1x8x256xf32>
    %cst_10 = arith.constant 6.250000e-02 : f32
    %29 = vector.broadcast %cst_10 : f32 to vector<1x8x256xf32>
    %30 = arith.mulf %28, %29 : vector<1x8x256xf32>
    %31 = arith.truncf %30 : vector<1x8x256xf32> to vector<1x8x256xbf16>
    %32 = vector.extract_strided_slice %4 {offsets = [0, 0, 1024], sizes = [1, 8, 256], strides = [1, 1, 1]} : vector<1x8x2304xf32> to vector<1x8x256xf32>
    %33 = arith.truncf %32 : vector<1x8x256xf32> to vector<1x8x256xbf16>
    %34 = vector.extract_strided_slice %4 {offsets = [0, 0, 1280], sizes = [1, 8, 256], strides = [1, 1, 1]} : vector<1x8x2304xf32> to vector<1x8x256xf32>
    %35 = arith.truncf %34 : vector<1x8x256xf32> to vector<1x8x256xbf16>
    "tpu.trace_start"() <{level = 10 : i32, message = "bqd,bkd->bqk"}> : () -> ()
    %cst_11 = arith.constant dense<0.000000e+00> : vector<1x8x8xf32>
    %36 = tpu.matmul %31, %33, %cst_11 {dimension_numbers = #tpu.dot_dimension_numbers<[2], [2], [1], [1], [0, 0, 0, 1, 1, 1], [0], [0]>} : vector<1x8x256xbf16>, vector<1x8x256xbf16>, vector<1x8x8xf32> -> vector<1x8x8xf32>
    "tpu.trace_stop"() : () -> ()
    %cst_12 = arith.constant dense<0xFF800000> : vector<1x8xf32>
    %37 = vector.multi_reduction <maximumf>, %36, %cst_12 [1] : vector<1x8x8xf32> to vector<1x8xf32>
    %38 = vector.shape_cast %37 : vector<1x8xf32> to vector<1x1x8xf32>
    %39 = vector.broadcast %38 : vector<1x1x8xf32> to vector<1x8x8xf32>
    %40 = arith.subf %36, %39 : vector<1x8x8xf32>
    %41 = math.exp %40 : vector<1x8x8xf32>
    %cst_13 = arith.constant dense<0.000000e+00> : vector<1x8xf32>
    %42 = vector.multi_reduction <add>, %41, %cst_13 [1] : vector<1x8x8xf32> to vector<1x8xf32>
    %43 = vector.shape_cast %42 : vector<1x8xf32> to vector<1x1x8xf32>
    %44 = tpu.reciprocal %43 {approx = true} : vector<1x1x8xf32> -> vector<1x1x8xf32>
    %45 = vector.broadcast %44 : vector<1x1x8xf32> to vector<1x8x8xf32>
    %46 = arith.mulf %41, %45 : vector<1x8x8xf32>
    %47 = arith.truncf %46 : vector<1x8x8xf32> to vector<1x8x8xbf16>
    "tpu.trace_start"() <{level = 10 : i32, message = "bqk,bkd->bqd"}> : () -> ()
    %cst_14 = arith.constant dense<0.000000e+00> : vector<1x8x256xf32>
    %48 = tpu.matmul %47, %35, %cst_14 {dimension_numbers = #tpu.dot_dimension_numbers<[2], [1], [1], [2], [0, 0, 0, 1, 1, 2], [0], [0]>} : vector<1x8x8xbf16>, vector<1x8x256xbf16>, vector<1x8x256xf32> -> vector<1x8x256xf32>
    "tpu.trace_stop"() : () -> ()
    %49 = arith.addf %27, %48 : vector<1x8x256xf32>
    %50 = vector.extract_strided_slice %4 {offsets = [0, 0, 1536], sizes = [1, 8, 256], strides = [1, 1, 1]} : vector<1x8x2304xf32> to vector<1x8x256xf32>
    %cst_15 = arith.constant 6.250000e-02 : f32
    %51 = vector.broadcast %cst_15 : f32 to vector<1x8x256xf32>
    %52 = arith.mulf %50, %51 : vector<1x8x256xf32>
    %53 = arith.truncf %52 : vector<1x8x256xf32> to vector<1x8x256xbf16>
    %54 = vector.extract_strided_slice %4 {offsets = [0, 0, 1792], sizes = [1, 8, 256], strides = [1, 1, 1]} : vector<1x8x2304xf32> to vector<1x8x256xf32>
    %55 = arith.truncf %54 : vector<1x8x256xf32> to vector<1x8x256xbf16>
    %56 = vector.extract_strided_slice %4 {offsets = [0, 0, 2048], sizes = [1, 8, 256], strides = [1, 1, 1]} : vector<1x8x2304xf32> to vector<1x8x256xf32>
    %57 = arith.truncf %56 : vector<1x8x256xf32> to vector<1x8x256xbf16>
    "tpu.trace_start"() <{level = 10 : i32, message = "bqd,bkd->bqk"}> : () -> ()
    %cst_16 = arith.constant dense<0.000000e+00> : vector<1x8x8xf32>
    %58 = tpu.matmul %53, %55, %cst_16 {dimension_numbers = #tpu.dot_dimension_numbers<[2], [2], [1], [1], [0, 0, 0, 1, 1, 1], [0], [0]>} : vector<1x8x256xbf16>, vector<1x8x256xbf16>, vector<1x8x8xf32> -> vector<1x8x8xf32>
    "tpu.trace_stop"() : () -> ()
    %cst_17 = arith.constant dense<0xFF800000> : vector<1x8xf32>
    %59 = vector.multi_reduction <maximumf>, %58, %cst_17 [1] : vector<1x8x8xf32> to vector<1x8xf32>
    %60 = vector.shape_cast %59 : vector<1x8xf32> to vector<1x1x8xf32>
    %61 = vector.broadcast %60 : vector<1x1x8xf32> to vector<1x8x8xf32>
    %62 = arith.subf %58, %61 : vector<1x8x8xf32>
    %63 = math.exp %62 : vector<1x8x8xf32>
    %cst_18 = arith.constant dense<0.000000e+00> : vector<1x8xf32>
    %64 = vector.multi_reduction <add>, %63, %cst_18 [1] : vector<1x8x8xf32> to vector<1x8xf32>
    %65 = vector.shape_cast %64 : vector<1x8xf32> to vector<1x1x8xf32>
    %66 = tpu.reciprocal %65 {approx = true} : vector<1x1x8xf32> -> vector<1x1x8xf32>
    %67 = vector.broadcast %66 : vector<1x1x8xf32> to vector<1x8x8xf32>
    %68 = arith.mulf %63, %67 : vector<1x8x8xf32>
    %69 = arith.truncf %68 : vector<1x8x8xf32> to vector<1x8x8xbf16>
    "tpu.trace_start"() <{level = 10 : i32, message = "bqk,bkd->bqd"}> : () -> ()
    %cst_19 = arith.constant dense<0.000000e+00> : vector<1x8x256xf32>
    %70 = tpu.matmul %69, %57, %cst_19 {dimension_numbers = #tpu.dot_dimension_numbers<[2], [1], [1], [2], [0, 0, 0, 1, 1, 2], [0], [0]>} : vector<1x8x8xbf16>, vector<1x8x256xbf16>, vector<1x8x256xf32> -> vector<1x8x256xf32>
    "tpu.trace_stop"() : () -> ()
    %71 = arith.addf %49, %70 : vector<1x8x256xf32>
    %cst_20 = arith.constant 0.333333343 : f32
    %72 = vector.broadcast %cst_20 : f32 to vector<1x8x256xf32>
    %73 = arith.mulf %71, %72 : vector<1x8x256xf32>
    %74 = vector.shape_cast %73 : vector<1x8x256xf32> to vector<8x256xf32>
    %75 = arith.truncf %74 : vector<8x256xf32> to vector<8x256xbf16>
    %c0_21 = arith.constant 0 : index
    %c0_22 = arith.constant 0 : index
    %76 = vector.load %arg3[%c0_21, %c0_22] : memref<256x256xbf16, #tpu.memory_space<vmem>>, vector<256x256xbf16>
    %cst_23 = arith.constant dense<0.000000e+00> : vector<8x256xf32>
    %77 = tpu.matmul %75, %76, %cst_23 {dimension_numbers = #tpu.dot_dimension_numbers<[1], [0], [0], [1], [0, 0, 1, 1], [], []>} : vector<8x256xbf16>, vector<256x256xbf16>, vector<8x256xf32> -> vector<8x256xf32>
    %c0_24 = arith.constant 0 : index
    %c0_25 = arith.constant 0 : index
    %78 = vector.load %arg4[%c0_24, %c0_25] : memref<1x256xf32, #tpu.memory_space<vmem>>, vector<1x256xf32>
    %79 = vector.broadcast %78 : vector<1x256xf32> to vector<8x256xf32>
    %80 = arith.addf %77, %79 : vector<8x256xf32>
    %81 = vector.shape_cast %80 : vector<8x256xf32> to vector<1x8x256xf32>
    %c0_26 = arith.constant 0 : index
    %c0_27 = arith.constant 0 : index
    %c0_28 = arith.constant 0 : index
    %82 = vector.load %arg5[%c0_26, %c0_27, %c0_28] : memref<1x8x256xf32, #tpu.memory_space<vmem>>, vector<1x8x256xf32>
    tpu.vector_store %arg5[%c0_26, %c0_27, %c0_28], %81 {strides = array<i32>} : memref<1x8x256xf32, #tpu.memory_space<vmem>>, vector<1x8x256xf32>,
    return
  }
  func.func @transform_0(%arg0: i32) -> (i32, i32, i32) {
    %c0_i32 = arith.constant 0 : i32
    %c0_i32_0 = arith.constant 0 : i32
    %c0_i32_1 = arith.constant 0 : i32
    return %arg0, %c0_i32, %c0_i32_0 : i32, i32, i32
  }
  func.func @transform_1(%arg0: i32) -> (i32, i32) {
    %c0_i32 = arith.constant 0 : i32
    %c0_i32_0 = arith.constant 0 : i32
    %c0_i32_1 = arith.constant 0 : i32
    return %c0_i32, %c0_i32_0 : i32, i32
  }
  func.func @transform_2(%arg0: i32) -> (i32, i32) {
    %c0_i32 = arith.constant 0 : i32
    %c0_i32_0 = arith.constant 0 : i32
    %c0_i32_1 = arith.constant 0 : i32
    return %c0_i32, %c0_i32_0 : i32, i32
  }
  func.func @transform_3(%arg0: i32) -> (i32, i32) {
    %c0_i32 = arith.constant 0 : i32
    %c0_i32_0 = arith.constant 0 : i32
    %c0_i32_1 = arith.constant 0 : i32
    return %c0_i32, %c0_i32_0 : i32, i32
  }
  func.func @transform_4(%arg0: i32) -> (i32, i32, i32) {
    %c0_i32 = arith.constant 0 : i32
    %c0_i32_0 = arith.constant 0 : i32
    %c0_i32_1 = arith.constant 0 : i32
    return %arg0, %c0_i32, %c0_i32_0 : i32, i32, i32
  }
}

</mosaic_0001>

<llo_original>
// kernel: tpu_custom_call.1
$region0: #{tpu_custom_call.1}
  #allocation0 [shape = 'u32[]', space=smem, size = 0x4, offset = 0x4, fixed_abs, tag = 'smem constant byte address 0x4 - core index']
  #allocation1 [shape = 'u32[144,128]{1,0:T(1,128)}', space=vmem, size = 0x12000, scoped, tag = 'internal scratch']
  %s0 = inlined_call_operand.hbm [shape: bf16[2,8,256], index: 0, kind: input, shape index: {}]
  %s1 = inlined_call_operand.hbm [shape: bf16[256,2304], index: 1, kind: input, shape index: {}]
  %s2 = inlined_call_operand.hbm [shape: bf16[256,256], index: 2, kind: input, shape index: {}]
  %s3 = inlined_call_operand.hbm [shape: f32[1,256], index: 3, kind: input, shape index: {}]
  %s4 = inlined_call_operand.hbm [shape: f32[2,8,256], index: 4, kind: output, shape index: {}]
  %s5 = sld [smem:[#allocation0]]
  $region65: #{tpu_custom_call.1} parent=0
    _
  %s7 = ssub.s32 1, %s5
  %s8 = scalar_select 0, %s7, %s5
  $region1: #{tpu_custom_call.1} parent=0
    #allocation2 [shape = 'u8[8192]{0}', space=vmem, size = 0x2000, scoped, tag = 'input window, operand 0']
    #allocation3 [shape = 's32[2]{0}', space=sflag, size = 0x8, scoped, tag = 'scoped memory for tpu_custom_call.1']
    #allocation4 [shape = 's32[2]{0}', space=sflag, size = 0x8, scoped, tag = 'scoped memory for tpu_custom_call.1']
    #allocation5 [shape = 'u8[1179648]{0}', space=vmem, size = 0x120000, scoped, tag = 'input window, operand 1, single buffered']
    #allocation6 [shape = 's32[1]{0}', space=sflag, size = 0x4, scoped, tag = 'scoped memory for tpu_custom_call.1']
    #allocation7 [shape = 'u8[131072]{0}', space=vmem, size = 0x20000, scoped, tag = 'input window, operand 2, single buffered']
    #allocation8 [shape = 'u8[1024]{0}', space=vmem, size = 0x400, scoped, tag = 'input window, operand 3, single buffered']
    #allocation9 [shape = 's32[1]{0}', space=sflag, size = 0x4, scoped, tag = 'scoped memory for tpu_custom_call.1']
    #allocation10 [shape = 'u8[16384]{0}', space=vmem, size = 0x4000, scoped, tag = 'output window, operand 0']
    %9 = vsyncpa [#allocation3], 0
    %s10 = scalar_lea.sflag [#allocation3], 1
    %11 = vsyncpa %s10, 0
    %12 = vsyncpa [#allocation6], 0
    %13 = vsyncpa [#allocation9], 0
    %14 = vsyncpa [#allocation4], 0
    %s15 = scalar_lea.sflag [#allocation4], 1
    %16 = vsyncpa %s15, 0
    loop: start=0, step=1, limit=4
    $region2: #{tpu_custom_call.1} parent=1 // loop_pre_header
      _
    $region3: #{tpu_custom_call.1} parent=1 // loop_header
      %s18 = sphi 0, %s22
      %p19 = scmp.ge.s32.totalorder %s18, 4
      %s28 = sphi 0, %s30
      %s31 = sphi 0, %s28
      %s32 = sphi 0, %s31
      %s48 = sphi 0, %s32
      %s52 = sphi 0, %s52
      %s54 = sphi 0, %s52
      %s55 = sphi 0, %s54
      %s69 = sphi 0, %s55
      %s73 = sphi 0, %s73
      %s75 = sphi 0, %s73
      %s76 = sphi 0, %s75
      %s90 = sphi 0, %s76
      %s94 = sphi 0, %s94
      %s96 = sphi 0, %s94
      %s97 = sphi 0, %s96
      %s111 = sphi 0, %s97
      %s117 = sphi 0, %s119
      %s120 = sphi 0, %s117
      %s121 = sphi 0, %s120
      %s137 = sphi 0, %s121
    $region4: #{tpu_custom_call.1} parent=1 // loop_header_branch
      %21 = sbr.rel (%p19) target = $region8
    $region5: #{tpu_custom_call.1} parent=1 // loop_body
      %s23 = ssub.s32 %s18, 1
      %s24 = ssub.s32 %s18, 2
      %s25 = sadd.s32 %s18, 1
      %s26 = ssub.s32 %s18, %s25
      %p27 = scmp.eq.s32.totalorder %s26, 0
      %s29 = sadd.s32 %s28, 1
      %s30 = scalar_select %p27, %s28, %s29
      %p33 = pneg %p27
      %p34 = scmp.eq.s32.totalorder %s18, 1
      %p35 = por %p33, %p34
      %p36 = scmp.ne.s32.totalorder %s28, %s31
      %p37 = scmp.eq.s32.totalorder %s18, 0
      %p38 = por %p36, %p37
      %p39 = scmp.ne.s32.totalorder %s28, %s31
      %p40 = scmp.eq.s32.totalorder %s23, 1
      %p41 = por %p39, %p40
      %p42 = scmp.ne.s32.totalorder %s31, %s32
      %p43 = scmp.eq.s32.totalorder %s23, 0
      %p44 = por %p42, %p43
      %p45 = scmp.ne.s32.totalorder %s31, %s32
      %p46 = scmp.eq.s32.totalorder %s24, 1
      %p47 = por %p45, %p46
      %p49 = scmp.ne.s32.totalorder %s32, %s48
      %p50 = scmp.eq.s32.totalorder %s24, 0
      %p51 = por %p49, %p50
      %s53 = sadd.s32 %s52, 1
      %p56 = scmp.eq.s32.totalorder %s18, 1
      %p57 = scmp.ne.s32.totalorder %s52, %s54
      %p58 = scmp.eq.s32.totalorder %s18, 0
      %p59 = por %p57, %p58
      %p60 = scmp.ne.s32.totalorder %s52, %s54
      %p61 = scmp.eq.s32.totalorder %s23, 1
      %p62 = por %p60, %p61
      %p63 = scmp.ne.s32.totalorder %s54, %s55
      %p64 = scmp.eq.s32.totalorder %s23, 0
      %p65 = por %p63, %p64
      %p66 = scmp.ne.s32.totalorder %s54, %s55
      %p67 = scmp.eq.s32.totalorder %s24, 1
      %p68 = por %p66, %p67
      %p70 = scmp.ne.s32.totalorder %s55, %s69
      %p71 = scmp.eq.s32.totalorder %s24, 0
      %p72 = por %p70, %p71
      %s74 = sadd.s32 %s73, 1
      %p77 = scmp.eq.s32.totalorder %s18, 1
      %p78 = scmp.ne.s32.totalorder %s73, %s75
      %p79 = scmp.eq.s32.totalorder %s18, 0
      %p80 = por %p78, %p79
      %p81 = scmp.ne.s32.totalorder %s73, %s75
      %p82 = scmp.eq.s32.totalorder %s23, 1
      %p83 = por %p81, %p82
      %p84 = scmp.ne.s32.totalorder %s75, %s76
      %p85 = scmp.eq.s32.totalorder %s23, 0
      %p86 = por %p84, %p85
      %p87 = scmp.ne.s32.totalorder %s75, %s76
      %p88 = scmp.eq.s32.totalorder %s24, 1
      %p89 = por %p87, %p88
      %p91 = scmp.ne.s32.totalorder %s76, %s90
      %p92 = scmp.eq.s32.totalorder %s24, 0
      %p93 = por %p91, %p92
      %s95 = sadd.s32 %s94, 1
      %p98 = scmp.eq.s32.totalorder %s18, 1
      %p99 = scmp.ne.s32.totalorder %s94, %s96
      %p100 = scmp.eq.s32.totalorder %s18, 0
      %p101 = por %p99, %p100
      %p102 = scmp.ne.s32.totalorder %s94, %s96
      %p103 = scmp.eq.s32.totalorder %s23, 1
      %p104 = por %p102, %p103
      %p105 = scmp.ne.s32.totalorder %s96, %s97
      %p106 = scmp.eq.s32.totalorder %s23, 0
      %p107 = por %p105, %p106
      %p108 = scmp.ne.s32.totalorder %s96, %s97
      %p109 = scmp.eq.s32.totalorder %s24, 1
      %p110 = por %p108, %p109
      %p112 = scmp.ne.s32.totalorder %s97, %s111
      %p113 = scmp.eq.s32.totalorder %s24, 0
      %p114 = por %p112, %p113
      %s115 = ssub.s32 %s18, %s25
      %p116 = scmp.eq.s32.totalorder %s115, 0
      %s118 = sadd.s32 %s117, 1
      %s119 = scalar_select %p116, %s117, %s118
      %p122 = pneg %p116
      %p123 = scmp.eq.s32.totalorder %s18, 1
      %p124 = por %p122, %p123
      %p125 = scmp.ne.s32.totalorder %s117, %s120
      %p126 = scmp.eq.s32.totalorder %s18, 0
      %p127 = por %p125, %p126
      %p128 = scmp.ne.s32.totalorder %s117, %s120
      %p129 = scmp.eq.s32.totalorder %s23, 1
      %p130 = por %p128, %p129
      %p131 = scmp.ne.s32.totalorder %s120, %s121
      %p132 = scmp.eq.s32.totalorder %s23, 0
      %p133 = por %p131, %p132
      %p134 = scmp.ne.s32.totalorder %s120, %s121
      %p135 = scmp.eq.s32.totalorder %s24, 1
      %p136 = por %p134, %p135
      %p138 = scmp.ne.s32.totalorder %s121, %s137
      %p139 = scmp.eq.s32.totalorder %s24, 0
      %p140 = por %p138, %p139
      %p141 = scmp.le.s32.totalorder 1, %s18
      %p142 = scmp.lt.s32.totalorder %s18, 3
      %p143 = pnand %p141, %p142
      %p144 = pneg %p143
      // Predicated region
      $region9: #{tpu_custom_call.1} parent=5 // pred_check
        _
      $region10: #{tpu_custom_call.1} parent=5 // pred_check_branch
        %146 = sbr.rel (%p143) target = $region12
      $region11: #{tpu_custom_call.1} parent=5 // pred_region
        %s147 = ssub.s32 %s18, 1
        // Predicated region
        $region13: #{tpu_custom_call.1} parent=11 // pred_check
          %p148 = pneg %p65
        $region14: #{tpu_custom_call.1} parent=11 // pred_check_branch
          %150 = sbr.rel (%p148) target = $region16
        $region15: #{tpu_custom_call.1} parent=11 // pred_region
          %s152 = ssub.s32 36864, 36864
          %153 = vsyncadd [#allocation6], %s152
          %s154 = sshll.u32 [#allocation5], 4
          %s155 = int_to_ptr.vmem [resolvable:$true] %s154
          %160 = dma.hbm_to_vmem [thread:$0]  %s1, 36864, %s155, [#allocation6], 1152, 1152, 72
        $region16: #{tpu_custom_call.1} parent=11 // pred_fallthru
          _
        // Predicated region
        $region17: #{tpu_custom_call.1} parent=11 // pred_check
          %p161 = pneg %p86
        $region18: #{tpu_custom_call.1} parent=11 // pred_check_branch
          %163 = sbr.rel (%p161) target = $region20
        $region19: #{tpu_custom_call.1} parent=11 // pred_region
          %s165 = ssub.s32 4096, 4096
          %166 = vsyncadd [#allocation6], %s165
          %s167 = sshll.u32 [#allocation7], 4
          %s168 = int_to_ptr.vmem [resolvable:$true] %s167
          %173 = dma.hbm_to_vmem [thread:$0]  %s2, 4096, %s168, [#allocation6], 128, 128, 8
        $region20: #{tpu_custom_call.1} parent=11 // pred_fallthru
          _
        // Predicated region
        $region21: #{tpu_custom_call.1} parent=11 // pred_check
          %p174 = pneg %p107
        $region22: #{tpu_custom_call.1} parent=11 // pred_check_branch
          %176 = sbr.rel (%p174) target = $region24
        $region23: #{tpu_custom_call.1} parent=11 // pred_region
          %s178 = ssub.s32 32, 32
          %179 = vsyncadd [#allocation9], %s178
          %s181 = sshll.u32 [#allocation8], 4
          %s182 = int_to_ptr.vmem [resolvable:$true] %s181
          %184 = dma.hbm_to_vmem [thread:$0]  %s3, 32, %s182, [#allocation9]
        $region24: #{tpu_custom_call.1} parent=11 // pred_fallthru
          _
      $region12: #{tpu_custom_call.1} parent=5 // pred_fallthru
        _
      %p185 = scmp.lt.s32.totalorder %s18, 2
      // Predicated region
      $region25: #{tpu_custom_call.1} parent=5 // pred_check
        %p186 = pneg %p185
      $region26: #{tpu_custom_call.1} parent=5 // pred_check_branch
        %188 = sbr.rel (%p186) target = $region28
      $region27: #{tpu_custom_call.1} parent=5 // pred_region
        // Predicated region
        $region29: #{tpu_custom_call.1} parent=27 // pred_check
          %p189 = pneg %p38
        $region30: #{tpu_custom_call.1} parent=27 // pred_check_branch
          %191 = sbr.rel (%p189) target = $region32
        $region31: #{tpu_custom_call.1} parent=27 // pred_region
          %s192 = sand.u32 %s28, 1
          %s193 = scalar_lea.sflag [#allocation3], %s192
          %s194 = sand.u32 %s28, 1
          %s195 = smul.addr %s194, 8
          %s196 = scalar_lea.vmem [#allocation2], %s195
          %s198 = ssub.s32 128, 128
          %199 = vsyncadd %s193, %s198
          %s200 = smul.addr %s18, 2
          %s201 = smul.addr %s200, 64
          %s202 = scalar_lea.hbm %s0, %s201
          %s204 = sshll.u32 %s196, 4
          %s205 = int_to_ptr.vmem [resolvable:$true] %s204
          %207 = dma.hbm_to_vmem [thread:$0]  %s202, 128, %s205, %s193
        $region32: #{tpu_custom_call.1} parent=27 // pred_fallthru
          _
      $region28: #{tpu_custom_call.1} parent=5 // pred_fallthru
        _
      %p208 = scmp.le.s32.totalorder 1, %s18
      %p209 = scmp.lt.s32.totalorder %s18, 3
      %p210 = pnand %p208, %p209
      %p211 = pneg %p210
      // Predicated region
      $region33: #{tpu_custom_call.1} parent=5 // pred_check
        _
      $region34: #{tpu_custom_call.1} parent=5 // pred_check_branch
        %213 = sbr.rel (%p210) target = $region36
      $region35: #{tpu_custom_call.1} parent=5 // pred_region
        %s214 = ssub.s32 %s18, 1
        %s215 = sand.u32 %s31, 1
        %s216 = scalar_lea.sflag [#allocation3], %s215
        %s217 = sand.u32 %s31, 1
        %s218 = smul.addr %s217, 8
        %s219 = scalar_lea.vmem [#allocation2], %s218
        // Predicated region
        $region37: #{tpu_custom_call.1} parent=35 // pred_check
          %p220 = pneg %p44
        $region38: #{tpu_custom_call.1} parent=35 // pred_check_branch
          %222 = sbr.rel (%p220) target = $region40
        $region39: #{tpu_custom_call.1} parent=35 // pred_region
          %223 = dma.done %s216, 128
        $region40: #{tpu_custom_call.1} parent=35 // pred_fallthru
          _
        // Predicated region
        $region41: #{tpu_custom_call.1} parent=35 // pred_check
          %p224 = pneg %p65
        $region42: #{tpu_custom_call.1} parent=35 // pred_check_branch
          %226 = sbr.rel (%p224) target = $region44
        $region43: #{tpu_custom_call.1} parent=35 // pred_region
          %227 = dma.done [#allocation6], 36864
        $region44: #{tpu_custom_call.1} parent=35 // pred_fallthru
          _
        // Predicated region
        $region45: #{tpu_custom_call.1} parent=35 // pred_check
          %p228 = pneg %p86
        $region46: #{tpu_custom_call.1} parent=35 // pred_check_branch
          %230 = sbr.rel (%p228) target = $region48
        $region47: #{tpu_custom_call.1} parent=35 // pred_region
          %231 = dma.done [#allocation6], 4096
        $region48: #{tpu_custom_call.1} parent=35 // pred_fallthru
          _
        // Predicated region
        $region49: #{tpu_custom_call.1} parent=35 // pred_check
          %p232 = pneg %p107
        $region50: #{tpu_custom_call.1} parent=35 // pred_check_branch
          %234 = sbr.rel (%p232) target = $region52
        $region51: #{tpu_custom_call.1} parent=35 // pred_region
          %235 = dma.done [#allocation9], 32
        $region52: #{tpu_custom_call.1} parent=35 // pred_fallthru
          _
        %s236 = sand.u32 %s31, 1
        %s237 = scalar_lea.sflag [#allocation3], %s236
        %s238 = sand.u32 %s31, 1
        %s239 = smul.addr %s238, 8
        %s240 = scalar_lea.vmem [#allocation2], %s239
        %p241 = pneg %p44
        %p242 = pneg %p41
        %p243 = pneg %p65
        %p244 = pneg %p62
        %p245 = pneg %p86
        %p246 = pneg %p83
        %p247 = pneg %p107
        %p248 = pneg %p104
        %p249 = pneg %p133
        %p250 = pneg %p130
        %s251 = sand.u32 %s120, 1
        %s252 = scalar_lea.sflag [#allocation4], %s251
        %s253 = sand.u32 %s120, 1
        %s254 = smul.addr %s253, 16
        %s255 = scalar_lea.vmem [#allocation10], %s254
        %v257 = vld [vmem:[%s219] sm:$0xff]
        %v258 = vld [vmem:[#allocation5] sm:$0xff]
        %v259 = vld [vmem:[#allocation5 + $0x8] sm:$0xff]
        %v260 = vld [vmem:[#allocation5 + $0x10] sm:$0xff]
        %v261 = vld [vmem:[#allocation5 + $0x18] sm:$0xff]
        %v262 = vld [vmem:[#allocation5 + $0x20] sm:$0xff]
        %v263 = vld [vmem:[#allocation5 + $0x28] sm:$0xff]
        %v264 = vld [vmem:[#allocation5 + $0x30] sm:$0xff]
        %v265 = vld [vmem:[#allocation5 + $0x38] sm:$0xff]
        %v266 = vld [vmem:[#allocation5 + $0x40] sm:$0xff]
        %v267 = vld [vmem:[#allocation5 + $0x48] sm:$0xff]
        %v268 = vld [vmem:[#allocation5 + $0x50] sm:$0xff]
        %v269 = vld [vmem:[#allocation5 + $0x58] sm:$0xff]
        %v270 = vld [vmem:[#allocation5 + $0x60] sm:$0xff]
        %v271 = vld [vmem:[#allocation5 + $0x68] sm:$0xff]
        %v272 = vld [vmem:[#allocation5 + $0x70] sm:$0xff]
        %v273 = vld [vmem:[#allocation5 + $0x78] sm:$0xff]
        %v274 = vld [vmem:[#allocation5 + $0x80] sm:$0xff]
        %v275 = vld [vmem:[#allocation5 + $0x88] sm:$0xff]
        %v276 = vld [vmem:[#allocation5 + $0x90] sm:$0xff]
        %v277 = vld [vmem:[#allocation5 + $0x98] sm:$0xff]
        %v278 = vld [vmem:[#allocation5 + $0xa0] sm:$0xff]
        %v279 = vld [vmem:[#allocation5 + $0xa8] sm:$0xff]
        %v280 = vld [vmem:[#allocation5 + $0xb0] sm:$0xff]
        %v281 = vld [vmem:[#allocation5 + $0xb8] sm:$0xff]
        %v282 = vld [vmem:[#allocation5 + $0xc0] sm:$0xff]
        %v283 = vld [vmem:[#allocation5 + $0xc8] sm:$0xff]
        %v284 = vld [vmem:[#allocation5 + $0xd0] sm:$0xff]
        %v285 = vld [vmem:[#allocation5 + $0xd8] sm:$0xff]
        %v286 = vld [vmem:[#allocation5 + $0xe0] sm:$0xff]
        %v287 = vld [vmem:[#allocation5 + $0xe8] sm:$0xff]
        %v288 = vld [vmem:[#allocation5 + $0xf0] sm:$0xff]
        %v289 = vld [vmem:[#allocation5 + $0xf8] sm:$0xff]
        %v290 = vld [vmem:[#allocation5 + $0x100] sm:$0xff]
        %v291 = vld [vmem:[#allocation5 + $0x108] sm:$0xff]
        %v292 = vld [vmem:[#allocation5 + $0x110] sm:$0xff]
        %v293 = vld [vmem:[#allocation5 + $0x118] sm:$0xff]
        %v294 = vld [vmem:[#allocation5 + $0x120] sm:$0xff]
        %v295 = vld [vmem:[#allocation5 + $0x128] sm:$0xff]
        %v296 = vld [vmem:[#allocation5 + $0x130] sm:$0xff]
        %v297 = vld [vmem:[#allocation5 + $0x138] sm:$0xff]
        %v298 = vld [vmem:[#allocation5 + $0x140] sm:$0xff]
        %v299 = vld [vmem:[#allocation5 + $0x148] sm:$0xff]
        %v300 = vld [vmem:[#allocation5 + $0x150] sm:$0xff]
        %v301 = vld [vmem:[#allocation5 + $0x158] sm:$0xff]
        %v302 = vld [vmem:[#allocation5 + $0x160] sm:$0xff]
        %v303 = vld [vmem:[#allocation5 + $0x168] sm:$0xff]
        %v304 = vld [vmem:[#allocation5 + $0x170] sm:$0xff]
        %v305 = vld [vmem:[#allocation5 + $0x178] sm:$0xff]
        %v306 = vld [vmem:[#allocation5 + $0x180] sm:$0xff]
        %v307 = vld [vmem:[#allocation5 + $0x188] sm:$0xff]
        %v308 = vld [vmem:[#allocation5 + $0x190] sm:$0xff]
        %v309 = vld [vmem:[#allocation5 + $0x198] sm:$0xff]
        %v310 = vld [vmem:[#allocation5 + $0x1a0] sm:$0xff]
        %v311 = vld [vmem:[#allocation5 + $0x1a8] sm:$0xff]
        %v312 = vld [vmem:[#allocation5 + $0x1b0] sm:$0xff]
        %v313 = vld [vmem:[#allocation5 + $0x1b8] sm:$0xff]
        %v314 = vld [vmem:[#allocation5 + $0x1c0] sm:$0xff]
        %v315 = vld [vmem:[#allocation5 + $0x1c8] sm:$0xff]
        %v316 = vld [vmem:[#allocation5 + $0x1d0] sm:$0xff]
        %v317 = vld [vmem:[#allocation5 + $0x1d8] sm:$0xff]
        %v318 = vld [vmem:[#allocation5 + $0x1e0] sm:$0xff]
        %v319 = vld [vmem:[#allocation5 + $0x1e8] sm:$0xff]
        %v320 = vld [vmem:[#allocation5 + $0x1f0] sm:$0xff]
        %v321 = vld [vmem:[#allocation5 + $0x1f8] sm:$0xff]
        %v322 = vld [vmem:[#allocation5 + $0x200] sm:$0xff]
        %v323 = vld [vmem:[#allocation5 + $0x208] sm:$0xff]
        %v324 = vld [vmem:[#allocation5 + $0x210] sm:$0xff]
        %v325 = vld [vmem:[#allocation5 + $0x218] sm:$0xff]
        %v326 = vld [vmem:[#allocation5 + $0x220] sm:$0xff]
        %v327 = vld [vmem:[#allocation5 + $0x228] sm:$0xff]
        %v328 = vld [vmem:[#allocation5 + $0x230] sm:$0xff]
        %v329 = vld [vmem:[#allocation5 + $0x238] sm:$0xff]
        %v330 = vld [vmem:[#allocation5 + $0x240] sm:$0xff]
        %v331 = vld [vmem:[#allocation5 + $0x248] sm:$0xff]
        %v332 = vld [vmem:[#allocation5 + $0x250] sm:$0xff]
        %v333 = vld [vmem:[#allocation5 + $0x258] sm:$0xff]
        %v334 = vld [vmem:[#allocation5 + $0x260] sm:$0xff]
        %v335 = vld [vmem:[#allocation5 + $0x268] sm:$0xff]
        %v336 = vld [vmem:[#allocation5 + $0x270] sm:$0xff]
        %v337 = vld [vmem:[#allocation5 + $0x278] sm:$0xff]
        %v338 = vld [vmem:[#allocation5 + $0x280] sm:$0xff]
        %v339 = vld [vmem:[#allocation5 + $0x288] sm:$0xff]
        %v340 = vld [vmem:[#allocation5 + $0x290] sm:$0xff]
        %v341 = vld [vmem:[#allocation5 + $0x298] sm:$0xff]
        %v342 = vld [vmem:[#allocation5 + $0x2a0] sm:$0xff]
        %v343 = vld [vmem:[#allocation5 + $0x2a8] sm:$0xff]
        %v344 = vld [vmem:[#allocation5 + $0x2b0] sm:$0xff]
        %v345 = vld [vmem:[#allocation5 + $0x2b8] sm:$0xff]
        %v346 = vld [vmem:[#allocation5 + $0x2c0] sm:$0xff]
        %v347 = vld [vmem:[#allocation5 + $0x2c8] sm:$0xff]
        %v348 = vld [vmem:[#allocation5 + $0x2d0] sm:$0xff]
        %v349 = vld [vmem:[#allocation5 + $0x2d8] sm:$0xff]
        %v350 = vld [vmem:[#allocation5 + $0x2e0] sm:$0xff]
        %v351 = vld [vmem:[#allocation5 + $0x2e8] sm:$0xff]
        %v352 = vld [vmem:[#allocation5 + $0x2f0] sm:$0xff]
        %v353 = vld [vmem:[#allocation5 + $0x2f8] sm:$0xff]
        %v354 = vld [vmem:[#allocation5 + $0x300] sm:$0xff]
        %v355 = vld [vmem:[#allocation5 + $0x308] sm:$0xff]
        %v356 = vld [vmem:[#allocation5 + $0x310] sm:$0xff]
        %v357 = vld [vmem:[#allocation5 + $0x318] sm:$0xff]
        %v358 = vld [vmem:[#allocation5 + $0x320] sm:$0xff]
        %v359 = vld [vmem:[#allocation5 + $0x328] sm:$0xff]
        %v360 = vld [vmem:[#allocation5 + $0x330] sm:$0xff]
        %v361 = vld [vmem:[#allocation5 + $0x338] sm:$0xff]
        %v362 = vld [vmem:[#allocation5 + $0x340] sm:$0xff]
        %v363 = vld [vmem:[#allocation5 + $0x348] sm:$0xff]
        %v364 = vld [vmem:[#allocation5 + $0x350] sm:$0xff]
        %v365 = vld [vmem:[#allocation5 + $0x358] sm:$0xff]
        %v366 = vld [vmem:[#allocation5 + $0x360] sm:$0xff]
        %v367 = vld [vmem:[#allocation5 + $0x368] sm:$0xff]
        %v368 = vld [vmem:[#allocation5 + $0x370] sm:$0xff]
        %v369 = vld [vmem:[#allocation5 + $0x378] sm:$0xff]
        %v370 = vld [vmem:[#allocation5 + $0x380] sm:$0xff]
        %v371 = vld [vmem:[#allocation5 + $0x388] sm:$0xff]
        %v372 = vld [vmem:[#allocation5 + $0x390] sm:$0xff]
        %v373 = vld [vmem:[#allocation5 + $0x398] sm:$0xff]
        %v374 = vld [vmem:[#allocation5 + $0x3a0] sm:$0xff]
        %v375 = vld [vmem:[#allocation5 + $0x3a8] sm:$0xff]
        %v376 = vld [vmem:[#allocation5 + $0x3b0] sm:$0xff]
        %v377 = vld [vmem:[#allocation5 + $0x3b8] sm:$0xff]
        %v378 = vld [vmem:[#allocation5 + $0x3c0] sm:$0xff]
        %v379 = vld [vmem:[#allocation5 + $0x3c8] sm:$0xff]
        %v380 = vld [vmem:[#allocation5 + $0x3d0] sm:$0xff]
        %v381 = vld [vmem:[#allocation5 + $0x3d8] sm:$0xff]
        %v382 = vld [vmem:[#allocation5 + $0x3e0] sm:$0xff]
        %v383 = vld [vmem:[#allocation5 + $0x3e8] sm:$0xff]
        %v384 = vld [vmem:[#allocation5 + $0x3f0] sm:$0xff]
        %v385 = vld [vmem:[#allocation5 + $0x3f8] sm:$0xff]
        %v386 = vld [vmem:[#allocation5 + $0x400] sm:$0xff]
        %v387 = vld [vmem:[#allocation5 + $0x408] sm:$0xff]
        %v388 = vld [vmem:[#allocation5 + $0x410] sm:$0xff]
        %v389 = vld [vmem:[#allocation5 + $0x418] sm:$0xff]
        %v390 = vld [vmem:[#allocation5 + $0x420] sm:$0xff]
        %v391 = vld [vmem:[#allocation5 + $0x428] sm:$0xff]
        %v392 = vld [vmem:[#allocation5 + $0x430] sm:$0xff]
        %v393 = vld [vmem:[#allocation5 + $0x438] sm:$0xff]
        %v394 = vld [vmem:[#allocation5 + $0x440] sm:$0xff]
        %v395 = vld [vmem:[#allocation5 + $0x448] sm:$0xff]
        %v396 = vld [vmem:[#allocation5 + $0x450] sm:$0xff]
        %v397 = vld [vmem:[#allocation5 + $0x458] sm:$0xff]
        %v398 = vld [vmem:[#allocation5 + $0x460] sm:$0xff]
        %v399 = vld [vmem:[#allocation5 + $0x468] sm:$0xff]
        %v400 = vld [vmem:[#allocation5 + $0x470] sm:$0xff]
        %v401 = vld [vmem:[#allocation5 + $0x478] sm:$0xff]
        %v402 = vld [vmem:[#allocation5 + $0x480] sm:$0xff]
        %v403 = vld [vmem:[#allocation5 + $0x488] sm:$0xff]
        %v404 = vld [vmem:[#allocation5 + $0x490] sm:$0xff]
        %v405 = vld [vmem:[#allocation5 + $0x498] sm:$0xff]
        %v406 = vld [vmem:[#allocation5 + $0x4a0] sm:$0xff]
        %v407 = vld [vmem:[#allocation5 + $0x4a8] sm:$0xff]
        %v408 = vld [vmem:[#allocation5 + $0x4b0] sm:$0xff]
        %v409 = vld [vmem:[#allocation5 + $0x4b8] sm:$0xff]
        %v410 = vld [vmem:[#allocation5 + $0x4c0] sm:$0xff]
        %v411 = vld [vmem:[#allocation5 + $0x4c8] sm:$0xff]
        %v412 = vld [vmem:[#allocation5 + $0x4d0] sm:$0xff]
        %v413 = vld [vmem:[#allocation5 + $0x4d8] sm:$0xff]
        %v414 = vld [vmem:[#allocation5 + $0x4e0] sm:$0xff]
        %v415 = vld [vmem:[#allocation5 + $0x4e8] sm:$0xff]
        %v416 = vld [vmem:[#allocation5 + $0x4f0] sm:$0xff]
        %v417 = vld [vmem:[#allocation5 + $0x4f8] sm:$0xff]
        %v418 = vld [vmem:[#allocation5 + $0x500] sm:$0xff]
        %v419 = vld [vmem:[#allocation5 + $0x508] sm:$0xff]
        %v420 = vld [vmem:[#allocation5 + $0x510] sm:$0xff]
        %v421 = vld [vmem:[#allocation5 + $0x518] sm:$0xff]
        %v422 = vld [vmem:[#allocation5 + $0x520] sm:$0xff]
        %v423 = vld [vmem:[#allocation5 + $0x528] sm:$0xff]
        %v424 = vld [vmem:[#allocation5 + $0x530] sm:$0xff]
        %v425 = vld [vmem:[#allocation5 + $0x538] sm:$0xff]
        %v426 = vld [vmem:[#allocation5 + $0x540] sm:$0xff]
        %v427 = vld [vmem:[#allocation5 + $0x548] sm:$0xff]
        %v428 = vld [vmem:[#allocation5 + $0x550] sm:$0xff]
        %v429 = vld [vmem:[#allocation5 + $0x558] sm:$0xff]
        %v430 = vld [vmem:[#allocation5 + $0x560] sm:$0xff]
        %v431 = vld [vmem:[#allocation5 + $0x568] sm:$0xff]
        %v432 = vld [vmem:[#allocation5 + $0x570] sm:$0xff]
        %v433 = vld [vmem:[#allocation5 + $0x578] sm:$0xff]
        %v434 = vld [vmem:[#allocation5 + $0x580] sm:$0xff]
        %v435 = vld [vmem:[#allocation5 + $0x588] sm:$0xff]
        %v436 = vld [vmem:[#allocation5 + $0x590] sm:$0xff]
        %v437 = vld [vmem:[#allocation5 + $0x598] sm:$0xff]
        %v438 = vld [vmem:[#allocation5 + $0x5a0] sm:$0xff]
        %v439 = vld [vmem:[#allocation5 + $0x5a8] sm:$0xff]
        %v440 = vld [vmem:[#allocation5 + $0x5b0] sm:$0xff]
        %v441 = vld [vmem:[#allocation5 + $0x5b8] sm:$0xff]
        %v442 = vld [vmem:[#allocation5 + $0x5c0] sm:$0xff]
        %v443 = vld [vmem:[#allocation5 + $0x5c8] sm:$0xff]
        %v444 = vld [vmem:[#allocation5 + $0x5d0] sm:$0xff]
        %v445 = vld [vmem:[#allocation5 + $0x5d8] sm:$0xff]
        %v446 = vld [vmem:[#allocation5 + $0x5e0] sm:$0xff]
        %v447 = vld [vmem:[#allocation5 + $0x5e8] sm:$0xff]
        %v448 = vld [vmem:[#allocation5 + $0x5f0] sm:$0xff]
        %v449 = vld [vmem:[#allocation5 + $0x5f8] sm:$0xff]
        %v450 = vld [vmem:[#allocation5 + $0x600] sm:$0xff]
        %v451 = vld [vmem:[#allocation5 + $0x608] sm:$0xff]
        %v452 = vld [vmem:[#allocation5 + $0x610] sm:$0xff]
        %v453 = vld [vmem:[#allocation5 + $0x618] sm:$0xff]
        %v454 = vld [vmem:[#allocation5 + $0x620] sm:$0xff]
        %v455 = vld [vmem:[#allocation5 + $0x628] sm:$0xff]
        %v456 = vld [vmem:[#allocation5 + $0x630] sm:$0xff]
        %v457 = vld [vmem:[#allocation5 + $0x638] sm:$0xff]
        %v458 = vld [vmem:[#allocation5 + $0x640] sm:$0xff]
        %v459 = vld [vmem:[#allocation5 + $0x648] sm:$0xff]
        %v460 = vld [vmem:[#allocation5 + $0x650] sm:$0xff]
        %v461 = vld [vmem:[#allocation5 + $0x658] sm:$0xff]
        %v462 = vld [vmem:[#allocation5 + $0x660] sm:$0xff]
        %v463 = vld [vmem:[#allocation5 + $0x668] sm:$0xff]
        %v464 = vld [vmem:[#allocation5 + $0x670] sm:$0xff]
        %v465 = vld [vmem:[#allocation5 + $0x678] sm:$0xff]
        %v466 = vld [vmem:[#allocation5 + $0x680] sm:$0xff]
        %v467 = vld [vmem:[#allocation5 + $0x688] sm:$0xff]
        %v468 = vld [vmem:[#allocation5 + $0x690] sm:$0xff]
        %v469 = vld [vmem:[#allocation5 + $0x698] sm:$0xff]
        %v470 = vld [vmem:[#allocation5 + $0x6a0] sm:$0xff]
        %v471 = vld [vmem:[#allocation5 + $0x6a8] sm:$0xff]
        %v472 = vld [vmem:[#allocation5 + $0x6b0] sm:$0xff]
        %v473 = vld [vmem:[#allocation5 + $0x6b8] sm:$0xff]
        %v474 = vld [vmem:[#allocation5 + $0x6c0] sm:$0xff]
        %v475 = vld [vmem:[#allocation5 + $0x6c8] sm:$0xff]
        %v476 = vld [vmem:[#allocation5 + $0x6d0] sm:$0xff]
        %v477 = vld [vmem:[#allocation5 + $0x6d8] sm:$0xff]
        %v478 = vld [vmem:[#allocation5 + $0x6e0] sm:$0xff]
        %v479 = vld [vmem:[#allocation5 + $0x6e8] sm:$0xff]
        %v480 = vld [vmem:[#allocation5 + $0x6f0] sm:$0xff]
        %v481 = vld [vmem:[#allocation5 + $0x6f8] sm:$0xff]
        %v482 = vld [vmem:[#allocation5 + $0x700] sm:$0xff]
        %v483 = vld [vmem:[#allocation5 + $0x708] sm:$0xff]
        %v484 = vld [vmem:[#allocation5 + $0x710] sm:$0xff]
        %v485 = vld [vmem:[#allocation5 + $0x718] sm:$0xff]
        %v486 = vld [vmem:[#allocation5 + $0x720] sm:$0xff]
        %v487 = vld [vmem:[#allocation5 + $0x728] sm:$0xff]
        %v488 = vld [vmem:[#allocation5 + $0x730] sm:$0xff]
        %v489 = vld [vmem:[#allocation5 + $0x738] sm:$0xff]
        %v490 = vld [vmem:[#allocation5 + $0x740] sm:$0xff]
        %v491 = vld [vmem:[#allocation5 + $0x748] sm:$0xff]
        %v492 = vld [vmem:[#allocation5 + $0x750] sm:$0xff]
        %v493 = vld [vmem:[#allocation5 + $0x758] sm:$0xff]
        %v494 = vld [vmem:[#allocation5 + $0x760] sm:$0xff]
        %v495 = vld [vmem:[#allocation5 + $0x768] sm:$0xff]
        %v496 = vld [vmem:[#allocation5 + $0x770] sm:$0xff]
        %v497 = vld [vmem:[#allocation5 + $0x778] sm:$0xff]
        %v498 = vld [vmem:[#allocation5 + $0x780] sm:$0xff]
        %v499 = vld [vmem:[#allocation5 + $0x788] sm:$0xff]
        %v500 = vld [vmem:[#allocation5 + $0x790] sm:$0xff]
        %v501 = vld [vmem:[#allocation5 + $0x798] sm:$0xff]
        %v502 = vld [vmem:[#allocation5 + $0x7a0] sm:$0xff]
        %v503 = vld [vmem:[#allocation5 + $0x7a8] sm:$0xff]
        %v504 = vld [vmem:[#allocation5 + $0x7b0] sm:$0xff]
        %v505 = vld [vmem:[#allocation5 + $0x7b8] sm:$0xff]
        %v506 = vld [vmem:[#allocation5 + $0x7c0] sm:$0xff]
        %v507 = vld [vmem:[#allocation5 + $0x7c8] sm:$0xff]
        %v508 = vld [vmem:[#allocation5 + $0x7d0] sm:$0xff]
        %v509 = vld [vmem:[#allocation5 + $0x7d8] sm:$0xff]
        %v510 = vld [vmem:[#allocation5 + $0x7e0] sm:$0xff]
        %v511 = vld [vmem:[#allocation5 + $0x7e8] sm:$0xff]
        %v512 = vld [vmem:[#allocation5 + $0x7f0] sm:$0xff]
        %v513 = vld [vmem:[#allocation5 + $0x7f8] sm:$0xff]
        %v514 = vld [vmem:[#allocation5 + $0x800] sm:$0xff]
        %v515 = vld [vmem:[#allocation5 + $0x808] sm:$0xff]
        %v516 = vld [vmem:[#allocation5 + $0x810] sm:$0xff]
        %v517 = vld [vmem:[#allocation5 + $0x818] sm:$0xff]
        %v518 = vld [vmem:[#allocation5 + $0x820] sm:$0xff]
        %v519 = vld [vmem:[#allocation5 + $0x828] sm:$0xff]
        %v520 = vld [vmem:[#allocation5 + $0x830] sm:$0xff]
        %v521 = vld [vmem:[#allocation5 + $0x838] sm:$0xff]
        %v522 = vld [vmem:[#allocation5 + $0x840] sm:$0xff]
        %v523 = vld [vmem:[#allocation5 + $0x848] sm:$0xff]
        %v524 = vld [vmem:[#allocation5 + $0x850] sm:$0xff]
        %v525 = vld [vmem:[#allocation5 + $0x858] sm:$0xff]
        %v526 = vld [vmem:[#allocation5 + $0x860] sm:$0xff]
        %v527 = vld [vmem:[#allocation5 + $0x868] sm:$0xff]
        %v528 = vld [vmem:[#allocation5 + $0x870] sm:$0xff]
        %v529 = vld [vmem:[#allocation5 + $0x878] sm:$0xff]
        %v530 = vld [vmem:[#allocation5 + $0x880] sm:$0xff]
        %v531 = vld [vmem:[#allocation5 + $0x888] sm:$0xff]
        %v532 = vld [vmem:[#allocation5 + $0x890] sm:$0xff]
        %v533 = vld [vmem:[#allocation5 + $0x898] sm:$0xff]
        %v534 = vld [vmem:[#allocation5 + $0x8a0] sm:$0xff]
        %v535 = vld [vmem:[#allocation5 + $0x8a8] sm:$0xff]
        %v536 = vld [vmem:[#allocation5 + $0x8b0] sm:$0xff]
        %v537 = vld [vmem:[#allocation5 + $0x8b8] sm:$0xff]
        %v538 = vld [vmem:[#allocation5 + $0x8c0] sm:$0xff]
        %v539 = vld [vmem:[#allocation5 + $0x8c8] sm:$0xff]
        %v540 = vld [vmem:[#allocation5 + $0x8d0] sm:$0xff]
        %v541 = vld [vmem:[#allocation5 + $0x8d8] sm:$0xff]
        %v542 = vld [vmem:[#allocation5 + $0x8e0] sm:$0xff]
        %v543 = vld [vmem:[#allocation5 + $0x8e8] sm:$0xff]
        %v544 = vld [vmem:[#allocation5 + $0x8f0] sm:$0xff]
        %v545 = vld [vmem:[#allocation5 + $0x8f8] sm:$0xff]
        %v547 = vunpack.c.l.b16 %v257
        %v548 = vunpack.c.h.b16 %v257
        %v549 = vpack.c.b16 %v547, %v547
        %v550 = vpack.c.b16 %v548, %v548
        %v841 = vunpack.c.l.b16 %v258
        %v842 = vunpack.c.h.b16 %v258
        %v843 = vunpack.c.l.b16 %v259
        %v844 = vunpack.c.h.b16 %v259
        %v845 = vunpack.c.l.b16 %v260
        %v846 = vunpack.c.h.b16 %v260
        %v847 = vunpack.c.l.b16 %v261
        %v848 = vunpack.c.h.b16 %v261
        %v849 = vunpack.c.l.b16 %v262
        %v850 = vunpack.c.h.b16 %v262
        %v851 = vunpack.c.l.b16 %v263
        %v852 = vunpack.c.h.b16 %v263
        %v853 = vunpack.c.l.b16 %v264
        %v854 = vunpack.c.h.b16 %v264
        %v855 = vunpack.c.l.b16 %v265
        %v856 = vunpack.c.h.b16 %v265
        %v857 = vunpack.c.l.b16 %v266
        %v858 = vunpack.c.h.b16 %v266
        %v859 = vunpack.c.l.b16 %v267
        %v860 = vunpack.c.h.b16 %v267
        %v861 = vunpack.c.l.b16 %v268
        %v862 = vunpack.c.h.b16 %v268
        %v863 = vunpack.c.l.b16 %v269
        %v864 = vunpack.c.h.b16 %v269
        %v865 = vunpack.c.l.b16 %v270
        %v866 = vunpack.c.h.b16 %v270
        %v867 = vunpack.c.l.b16 %v271
        %v868 = vunpack.c.h.b16 %v271
        %v869 = vunpack.c.l.b16 %v272
        %v870 = vunpack.c.h.b16 %v272
        %v871 = vunpack.c.l.b16 %v273
        %v872 = vunpack.c.h.b16 %v273
        %v873 = vunpack.c.l.b16 %v274
        %v874 = vunpack.c.h.b16 %v274
        %v875 = vunpack.c.l.b16 %v275
        %v876 = vunpack.c.h.b16 %v275
        %v877 = vunpack.c.l.b16 %v276
        %v878 = vunpack.c.h.b16 %v276
        %v879 = vunpack.c.l.b16 %v277
        %v880 = vunpack.c.h.b16 %v277
        %v881 = vunpack.c.l.b16 %v278
        %v882 = vunpack.c.h.b16 %v278
        %v883 = vunpack.c.l.b16 %v279
        %v884 = vunpack.c.h.b16 %v279
        %v885 = vunpack.c.l.b16 %v280
        %v886 = vunpack.c.h.b16 %v280
        %v887 = vunpack.c.l.b16 %v281
        %v888 = vunpack.c.h.b16 %v281
        %v889 = vunpack.c.l.b16 %v282
        %v890 = vunpack.c.h.b16 %v282
        %v891 = vunpack.c.l.b16 %v283
        %v892 = vunpack.c.h.b16 %v283
        %v893 = vunpack.c.l.b16 %v284
        %v894 = vunpack.c.h.b16 %v284
        %v895 = vunpack.c.l.b16 %v285
        %v896 = vunpack.c.h.b16 %v285
        %v897 = vunpack.c.l.b16 %v286
        %v898 = vunpack.c.h.b16 %v286
        %v899 = vunpack.c.l.b16 %v287
        %v900 = vunpack.c.h.b16 %v287
        %v901 = vunpack.c.l.b16 %v288
        %v902 = vunpack.c.h.b16 %v288
        %v903 = vunpack.c.l.b16 %v289
        %v904 = vunpack.c.h.b16 %v289
        %v905 = vunpack.c.l.b16 %v290
        %v906 = vunpack.c.h.b16 %v290
        %v907 = vunpack.c.l.b16 %v291
        %v908 = vunpack.c.h.b16 %v291
        %v909 = vunpack.c.l.b16 %v292
        %v910 = vunpack.c.h.b16 %v292
        %v911 = vunpack.c.l.b16 %v293
        %v912 = vunpack.c.h.b16 %v293
        %v913 = vunpack.c.l.b16 %v294
        %v914 = vunpack.c.h.b16 %v294
        %v915 = vunpack.c.l.b16 %v295
        %v916 = vunpack.c.h.b16 %v295
        %v917 = vunpack.c.l.b16 %v296
        %v918 = vunpack.c.h.b16 %v296
        %v919 = vunpack.c.l.b16 %v297
        %v920 = vunpack.c.h.b16 %v297
        %v921 = vunpack.c.l.b16 %v298
        %v922 = vunpack.c.h.b16 %v298
        %v923 = vunpack.c.l.b16 %v299
        %v924 = vunpack.c.h.b16 %v299
        %v925 = vunpack.c.l.b16 %v300
        %v926 = vunpack.c.h.b16 %v300
        %v927 = vunpack.c.l.b16 %v301
        %v928 = vunpack.c.h.b16 %v301
        %v929 = vunpack.c.l.b16 %v302
        %v930 = vunpack.c.h.b16 %v302
        %v931 = vunpack.c.l.b16 %v303
        %v932 = vunpack.c.h.b16 %v303
        %v933 = vunpack.c.l.b16 %v304
        %v934 = vunpack.c.h.b16 %v304
        %v935 = vunpack.c.l.b16 %v305
        %v936 = vunpack.c.h.b16 %v305
        %v937 = vunpack.c.l.b16 %v306
        %v938 = vunpack.c.h.b16 %v306
        %v939 = vunpack.c.l.b16 %v307
        %v940 = vunpack.c.h.b16 %v307
        %v941 = vunpack.c.l.b16 %v308
        %v942 = vunpack.c.h.b16 %v308
        %v943 = vunpack.c.l.b16 %v309
        %v944 = vunpack.c.h.b16 %v309
        %v945 = vunpack.c.l.b16 %v310
        %v946 = vunpack.c.h.b16 %v310
        %v947 = vunpack.c.l.b16 %v311
        %v948 = vunpack.c.h.b16 %v311
        %v949 = vunpack.c.l.b16 %v312
        %v950 = vunpack.c.h.b16 %v312
        %v951 = vunpack.c.l.b16 %v313
        %v952 = vunpack.c.h.b16 %v313
        %v953 = vunpack.c.l.b16 %v314
        %v954 = vunpack.c.h.b16 %v314
        %v955 = vunpack.c.l.b16 %v315
        %v956 = vunpack.c.h.b16 %v315
        %v957 = vunpack.c.l.b16 %v316
        %v958 = vunpack.c.h.b16 %v316
        %v959 = vunpack.c.l.b16 %v317
        %v960 = vunpack.c.h.b16 %v317
        %v961 = vunpack.c.l.b16 %v318
        %v962 = vunpack.c.h.b16 %v318
        %v963 = vunpack.c.l.b16 %v319
        %v964 = vunpack.c.h.b16 %v319
        %v965 = vunpack.c.l.b16 %v320
        %v966 = vunpack.c.h.b16 %v320
        %v967 = vunpack.c.l.b16 %v321
        %v968 = vunpack.c.h.b16 %v321
        %v969 = vunpack.c.l.b16 %v322
        %v970 = vunpack.c.h.b16 %v322
        %v971 = vunpack.c.l.b16 %v323
        %v972 = vunpack.c.h.b16 %v323
        %v973 = vunpack.c.l.b16 %v324
        %v974 = vunpack.c.h.b16 %v324
        %v975 = vunpack.c.l.b16 %v325
        %v976 = vunpack.c.h.b16 %v325
        %v977 = vunpack.c.l.b16 %v326
        %v978 = vunpack.c.h.b16 %v326
        %v979 = vunpack.c.l.b16 %v327
        %v980 = vunpack.c.h.b16 %v327
        %v981 = vunpack.c.l.b16 %v328
        %v982 = vunpack.c.h.b16 %v328
        %v983 = vunpack.c.l.b16 %v329
        %v984 = vunpack.c.h.b16 %v329
        %v985 = vunpack.c.l.b16 %v330
        %v986 = vunpack.c.h.b16 %v330
        %v987 = vunpack.c.l.b16 %v331
        %v988 = vunpack.c.h.b16 %v331
        %v989 = vunpack.c.l.b16 %v332
        %v990 = vunpack.c.h.b16 %v332
        %v991 = vunpack.c.l.b16 %v333
        %v992 = vunpack.c.h.b16 %v333
        %v993 = vunpack.c.l.b16 %v334
        %v994 = vunpack.c.h.b16 %v334
        %v995 = vunpack.c.l.b16 %v335
        %v996 = vunpack.c.h.b16 %v335
        %v997 = vunpack.c.l.b16 %v336
        %v998 = vunpack.c.h.b16 %v336
        %v999 = vunpack.c.l.b16 %v337
        %v1000 = vunpack.c.h.b16 %v337
        %v1001 = vunpack.c.l.b16 %v338
        %v1002 = vunpack.c.h.b16 %v338
        %v1003 = vunpack.c.l.b16 %v339
        %v1004 = vunpack.c.h.b16 %v339
        %v1005 = vunpack.c.l.b16 %v340
        %v1006 = vunpack.c.h.b16 %v340
        %v1007 = vunpack.c.l.b16 %v341
        %v1008 = vunpack.c.h.b16 %v341
        %v1009 = vunpack.c.l.b16 %v342
        %v1010 = vunpack.c.h.b16 %v342
        %v1011 = vunpack.c.l.b16 %v343
        %v1012 = vunpack.c.h.b16 %v343
        %v1013 = vunpack.c.l.b16 %v344
        %v1014 = vunpack.c.h.b16 %v344
        %v1015 = vunpack.c.l.b16 %v345
        %v1016 = vunpack.c.h.b16 %v345
        %v1017 = vunpack.c.l.b16 %v346
        %v1018 = vunpack.c.h.b16 %v346
        %v1019 = vunpack.c.l.b16 %v347
        %v1020 = vunpack.c.h.b16 %v347
        %v1021 = vunpack.c.l.b16 %v348
        %v1022 = vunpack.c.h.b16 %v348
        %v1023 = vunpack.c.l.b16 %v349
        %v1024 = vunpack.c.h.b16 %v349
        %v1025 = vunpack.c.l.b16 %v350
        %v1026 = vunpack.c.h.b16 %v350
        %v1027 = vunpack.c.l.b16 %v351
        %v1028 = vunpack.c.h.b16 %v351
        %v1029 = vunpack.c.l.b16 %v352
        %v1030 = vunpack.c.h.b16 %v352
        %v1031 = vunpack.c.l.b16 %v353
        %v1032 = vunpack.c.h.b16 %v353
        %v1033 = vunpack.c.l.b16 %v354
        %v1034 = vunpack.c.h.b16 %v354
        %v1035 = vunpack.c.l.b16 %v355
        %v1036 = vunpack.c.h.b16 %v355
        %v1037 = vunpack.c.l.b16 %v356
        %v1038 = vunpack.c.h.b16 %v356
        %v1039 = vunpack.c.l.b16 %v357
        %v1040 = vunpack.c.h.b16 %v357
        %v1041 = vunpack.c.l.b16 %v358
        %v1042 = vunpack.c.h.b16 %v358
        %v1043 = vunpack.c.l.b16 %v359
        %v1044 = vunpack.c.h.b16 %v359
        %v1045 = vunpack.c.l.b16 %v360
        %v1046 = vunpack.c.h.b16 %v360
        %v1047 = vunpack.c.l.b16 %v361
        %v1048 = vunpack.c.h.b16 %v361
        %v1049 = vunpack.c.l.b16 %v362
        %v1050 = vunpack.c.h.b16 %v362
        %v1051 = vunpack.c.l.b16 %v363
        %v1052 = vunpack.c.h.b16 %v363
        %v1053 = vunpack.c.l.b16 %v364
        %v1054 = vunpack.c.h.b16 %v364
        %v1055 = vunpack.c.l.b16 %v365
        %v1056 = vunpack.c.h.b16 %v365
        %v1057 = vunpack.c.l.b16 %v366
        %v1058 = vunpack.c.h.b16 %v366
        %v1059 = vunpack.c.l.b16 %v367
        %v1060 = vunpack.c.h.b16 %v367
        %v1061 = vunpack.c.l.b16 %v368
        %v1062 = vunpack.c.h.b16 %v368
        %v1063 = vunpack.c.l.b16 %v369
        %v1064 = vunpack.c.h.b16 %v369
        %v1065 = vunpack.c.l.b16 %v370
        %v1066 = vunpack.c.h.b16 %v370
        %v1067 = vunpack.c.l.b16 %v371
        %v1068 = vunpack.c.h.b16 %v371
        %v1069 = vunpack.c.l.b16 %v372
        %v1070 = vunpack.c.h.b16 %v372
        %v1071 = vunpack.c.l.b16 %v373
        %v1072 = vunpack.c.h.b16 %v373
        %v1073 = vunpack.c.l.b16 %v374
        %v1074 = vunpack.c.h.b16 %v374
        %v1075 = vunpack.c.l.b16 %v375
        %v1076 = vunpack.c.h.b16 %v375
        %v1077 = vunpack.c.l.b16 %v376
        %v1078 = vunpack.c.h.b16 %v376
        %v1079 = vunpack.c.l.b16 %v377
        %v1080 = vunpack.c.h.b16 %v377
        %v1081 = vunpack.c.l.b16 %v378
        %v1082 = vunpack.c.h.b16 %v378
        %v1083 = vunpack.c.l.b16 %v379
        %v1084 = vunpack.c.h.b16 %v379
        %v1085 = vunpack.c.l.b16 %v380
        %v1086 = vunpack.c.h.b16 %v380
        %v1087 = vunpack.c.l.b16 %v381
        %v1088 = vunpack.c.h.b16 %v381
        %v1089 = vunpack.c.l.b16 %v382
        %v1090 = vunpack.c.h.b16 %v382
        %v1091 = vunpack.c.l.b16 %v383
        %v1092 = vunpack.c.h.b16 %v383
        %v1093 = vunpack.c.l.b16 %v384
        %v1094 = vunpack.c.h.b16 %v384
        %v1095 = vunpack.c.l.b16 %v385
        %v1096 = vunpack.c.h.b16 %v385
        %v1097 = vunpack.c.l.b16 %v386
        %v1098 = vunpack.c.h.b16 %v386
        %v1099 = vunpack.c.l.b16 %v387
        %v1100 = vunpack.c.h.b16 %v387
        %v1101 = vunpack.c.l.b16 %v388
        %v1102 = vunpack.c.h.b16 %v388
        %v1103 = vunpack.c.l.b16 %v389
        %v1104 = vunpack.c.h.b16 %v389
        %v1105 = vunpack.c.l.b16 %v390
        %v1106 = vunpack.c.h.b16 %v390
        %v1107 = vunpack.c.l.b16 %v391
        %v1108 = vunpack.c.h.b16 %v391
        %v1109 = vunpack.c.l.b16 %v392
        %v1110 = vunpack.c.h.b16 %v392
        %v1111 = vunpack.c.l.b16 %v393
        %v1112 = vunpack.c.h.b16 %v393
        %v1113 = vunpack.c.l.b16 %v394
        %v1114 = vunpack.c.h.b16 %v394
        %v1115 = vunpack.c.l.b16 %v395
        %v1116 = vunpack.c.h.b16 %v395
        %v1117 = vunpack.c.l.b16 %v396
        %v1118 = vunpack.c.h.b16 %v396
        %v1119 = vunpack.c.l.b16 %v397
        %v1120 = vunpack.c.h.b16 %v397
        %v1121 = vunpack.c.l.b16 %v398
        %v1122 = vunpack.c.h.b16 %v398
        %v1123 = vunpack.c.l.b16 %v399
        %v1124 = vunpack.c.h.b16 %v399
        %v1125 = vunpack.c.l.b16 %v400
        %v1126 = vunpack.c.h.b16 %v400
        %v1127 = vunpack.c.l.b16 %v401
        %v1128 = vunpack.c.h.b16 %v401
        %v1129 = vunpack.c.l.b16 %v402
        %v1130 = vunpack.c.h.b16 %v402
        %v1131 = vunpack.c.l.b16 %v403
        %v1132 = vunpack.c.h.b16 %v403
        %v1133 = vunpack.c.l.b16 %v404
        %v1134 = vunpack.c.h.b16 %v404
        %v1135 = vunpack.c.l.b16 %v405
        %v1136 = vunpack.c.h.b16 %v405
        %v1137 = vunpack.c.l.b16 %v406
        %v1138 = vunpack.c.h.b16 %v406
        %v1139 = vunpack.c.l.b16 %v407
        %v1140 = vunpack.c.h.b16 %v407
        %v1141 = vunpack.c.l.b16 %v408
        %v1142 = vunpack.c.h.b16 %v408
        %v1143 = vunpack.c.l.b16 %v409
        %v1144 = vunpack.c.h.b16 %v409
        %v1145 = vunpack.c.l.b16 %v410
        %v1146 = vunpack.c.h.b16 %v410
        %v1147 = vunpack.c.l.b16 %v411
        %v1148 = vunpack.c.h.b16 %v411
        %v1149 = vunpack.c.l.b16 %v412
        %v1150 = vunpack.c.h.b16 %v412
        %v1151 = vunpack.c.l.b16 %v413
        %v1152 = vunpack.c.h.b16 %v413
        %v1153 = vunpack.c.l.b16 %v414
        %v1154 = vunpack.c.h.b16 %v414
        %v1155 = vunpack.c.l.b16 %v415
        %v1156 = vunpack.c.h.b16 %v415
        %v1157 = vunpack.c.l.b16 %v416
        %v1158 = vunpack.c.h.b16 %v416
        %v1159 = vunpack.c.l.b16 %v417
        %v1160 = vunpack.c.h.b16 %v417
        %v1161 = vunpack.c.l.b16 %v418
        %v1162 = vunpack.c.h.b16 %v418
        %v1163 = vunpack.c.l.b16 %v419
        %v1164 = vunpack.c.h.b16 %v419
        %v1165 = vunpack.c.l.b16 %v420
        %v1166 = vunpack.c.h.b16 %v420
        %v1167 = vunpack.c.l.b16 %v421
        %v1168 = vunpack.c.h.b16 %v421
        %v1169 = vunpack.c.l.b16 %v422
        %v1170 = vunpack.c.h.b16 %v422
        %v1171 = vunpack.c.l.b16 %v423
        %v1172 = vunpack.c.h.b16 %v423
        %v1173 = vunpack.c.l.b16 %v424
        %v1174 = vunpack.c.h.b16 %v424
        %v1175 = vunpack.c.l.b16 %v425
        %v1176 = vunpack.c.h.b16 %v425
        %v1177 = vunpack.c.l.b16 %v426
        %v1178 = vunpack.c.h.b16 %v426
        %v1179 = vunpack.c.l.b16 %v427
        %v1180 = vunpack.c.h.b16 %v427
        %v1181 = vunpack.c.l.b16 %v428
        %v1182 = vunpack.c.h.b16 %v428
        %v1183 = vunpack.c.l.b16 %v429
        %v1184 = vunpack.c.h.b16 %v429
        %v1185 = vunpack.c.l.b16 %v430
        %v1186 = vunpack.c.h.b16 %v430
        %v1187 = vunpack.c.l.b16 %v431
        %v1188 = vunpack.c.h.b16 %v431
        %v1189 = vunpack.c.l.b16 %v432
        %v1190 = vunpack.c.h.b16 %v432
        %v1191 = vunpack.c.l.b16 %v433
        %v1192 = vunpack.c.h.b16 %v433
        %v1193 = vunpack.c.l.b16 %v434
        %v1194 = vunpack.c.h.b16 %v434
        %v1195 = vunpack.c.l.b16 %v435
        %v1196 = vunpack.c.h.b16 %v435
        %v1197 = vunpack.c.l.b16 %v436
        %v1198 = vunpack.c.h.b16 %v436
        %v1199 = vunpack.c.l.b16 %v437
        %v1200 = vunpack.c.h.b16 %v437
        %v1201 = vunpack.c.l.b16 %v438
        %v1202 = vunpack.c.h.b16 %v438
        %v1203 = vunpack.c.l.b16 %v439
        %v1204 = vunpack.c.h.b16 %v439
        %v1205 = vunpack.c.l.b16 %v440
        %v1206 = vunpack.c.h.b16 %v440
        %v1207 = vunpack.c.l.b16 %v441
        %v1208 = vunpack.c.h.b16 %v441
        %v1209 = vunpack.c.l.b16 %v442
        %v1210 = vunpack.c.h.b16 %v442
        %v1211 = vunpack.c.l.b16 %v443
        %v1212 = vunpack.c.h.b16 %v443
        %v1213 = vunpack.c.l.b16 %v444
        %v1214 = vunpack.c.h.b16 %v444
        %v1215 = vunpack.c.l.b16 %v445
        %v1216 = vunpack.c.h.b16 %v445
        %v1217 = vunpack.c.l.b16 %v446
        %v1218 = vunpack.c.h.b16 %v446
        %v1219 = vunpack.c.l.b16 %v447
        %v1220 = vunpack.c.h.b16 %v447
        %v1221 = vunpack.c.l.b16 %v448
        %v1222 = vunpack.c.h.b16 %v448
        %v1223 = vunpack.c.l.b16 %v449
        %v1224 = vunpack.c.h.b16 %v449
        %v1225 = vunpack.c.l.b16 %v450
        %v1226 = vunpack.c.h.b16 %v450
        %v1227 = vunpack.c.l.b16 %v451
        %v1228 = vunpack.c.h.b16 %v451
        %v1229 = vunpack.c.l.b16 %v452
        %v1230 = vunpack.c.h.b16 %v452
        %v1231 = vunpack.c.l.b16 %v453
        %v1232 = vunpack.c.h.b16 %v453
        %v1233 = vunpack.c.l.b16 %v454
        %v1234 = vunpack.c.h.b16 %v454
        %v1235 = vunpack.c.l.b16 %v455
        %v1236 = vunpack.c.h.b16 %v455
        %v1237 = vunpack.c.l.b16 %v456
        %v1238 = vunpack.c.h.b16 %v456
        %v1239 = vunpack.c.l.b16 %v457
        %v1240 = vunpack.c.h.b16 %v457
        %v1241 = vunpack.c.l.b16 %v458
        %v1242 = vunpack.c.h.b16 %v458
        %v1243 = vunpack.c.l.b16 %v459
        %v1244 = vunpack.c.h.b16 %v459
        %v1245 = vunpack.c.l.b16 %v460
        %v1246 = vunpack.c.h.b16 %v460
        %v1247 = vunpack.c.l.b16 %v461
        %v1248 = vunpack.c.h.b16 %v461
        %v1249 = vunpack.c.l.b16 %v462
        %v1250 = vunpack.c.h.b16 %v462
        %v1251 = vunpack.c.l.b16 %v463
        %v1252 = vunpack.c.h.b16 %v463
        %v1253 = vunpack.c.l.b16 %v464
        %v1254 = vunpack.c.h.b16 %v464
        %v1255 = vunpack.c.l.b16 %v465
        %v1256 = vunpack.c.h.b16 %v465
        %v1257 = vunpack.c.l.b16 %v466
        %v1258 = vunpack.c.h.b16 %v466
        %v1259 = vunpack.c.l.b16 %v467
        %v1260 = vunpack.c.h.b16 %v467
        %v1261 = vunpack.c.l.b16 %v468
        %v1262 = vunpack.c.h.b16 %v468
        %v1263 = vunpack.c.l.b16 %v469
        %v1264 = vunpack.c.h.b16 %v469
        %v1265 = vunpack.c.l.b16 %v470
        %v1266 = vunpack.c.h.b16 %v470
        %v1267 = vunpack.c.l.b16 %v471
        %v1268 = vunpack.c.h.b16 %v471
        %v1269 = vunpack.c.l.b16 %v472
        %v1270 = vunpack.c.h.b16 %v472
        %v1271 = vunpack.c.l.b16 %v473
        %v1272 = vunpack.c.h.b16 %v473
        %v1273 = vunpack.c.l.b16 %v474
        %v1274 = vunpack.c.h.b16 %v474
        %v1275 = vunpack.c.l.b16 %v475
        %v1276 = vunpack.c.h.b16 %v475
        %v1277 = vunpack.c.l.b16 %v476
        %v1278 = vunpack.c.h.b16 %v476
        %v1279 = vunpack.c.l.b16 %v477
        %v1280 = vunpack.c.h.b16 %v477
        %v1281 = vunpack.c.l.b16 %v478
        %v1282 = vunpack.c.h.b16 %v478
        %v1283 = vunpack.c.l.b16 %v479
        %v1284 = vunpack.c.h.b16 %v479
        %v1285 = vunpack.c.l.b16 %v480
        %v1286 = vunpack.c.h.b16 %v480
        %v1287 = vunpack.c.l.b16 %v481
        %v1288 = vunpack.c.h.b16 %v481
        %v1289 = vunpack.c.l.b16 %v482
        %v1290 = vunpack.c.h.b16 %v482
        %v1291 = vunpack.c.l.b16 %v483
        %v1292 = vunpack.c.h.b16 %v483
        %v1293 = vunpack.c.l.b16 %v484
        %v1294 = vunpack.c.h.b16 %v484
        %v1295 = vunpack.c.l.b16 %v485
        %v1296 = vunpack.c.h.b16 %v485
        %v1297 = vunpack.c.l.b16 %v486
        %v1298 = vunpack.c.h.b16 %v486
        %v1299 = vunpack.c.l.b16 %v487
        %v1300 = vunpack.c.h.b16 %v487
        %v1301 = vunpack.c.l.b16 %v488
        %v1302 = vunpack.c.h.b16 %v488
        %v1303 = vunpack.c.l.b16 %v489
        %v1304 = vunpack.c.h.b16 %v489
        %v1305 = vunpack.c.l.b16 %v490
        %v1306 = vunpack.c.h.b16 %v490
        %v1307 = vunpack.c.l.b16 %v491
        %v1308 = vunpack.c.h.b16 %v491
        %v1309 = vunpack.c.l.b16 %v492
        %v1310 = vunpack.c.h.b16 %v492
        %v1311 = vunpack.c.l.b16 %v493
        %v1312 = vunpack.c.h.b16 %v493
        %v1313 = vunpack.c.l.b16 %v494
        %v1314 = vunpack.c.h.b16 %v494
        %v1315 = vunpack.c.l.b16 %v495
        %v1316 = vunpack.c.h.b16 %v495
        %v1317 = vunpack.c.l.b16 %v496
        %v1318 = vunpack.c.h.b16 %v496
        %v1319 = vunpack.c.l.b16 %v497
        %v1320 = vunpack.c.h.b16 %v497
        %v1321 = vunpack.c.l.b16 %v498
        %v1322 = vunpack.c.h.b16 %v498
        %v1323 = vunpack.c.l.b16 %v499
        %v1324 = vunpack.c.h.b16 %v499
        %v1325 = vunpack.c.l.b16 %v500
        %v1326 = vunpack.c.h.b16 %v500
        %v1327 = vunpack.c.l.b16 %v501
        %v1328 = vunpack.c.h.b16 %v501
        %v1329 = vunpack.c.l.b16 %v502
        %v1330 = vunpack.c.h.b16 %v502
        %v1331 = vunpack.c.l.b16 %v503
        %v1332 = vunpack.c.h.b16 %v503
        %v1333 = vunpack.c.l.b16 %v504
        %v1334 = vunpack.c.h.b16 %v504
        %v1335 = vunpack.c.l.b16 %v505
        %v1336 = vunpack.c.h.b16 %v505
        %v1337 = vunpack.c.l.b16 %v506
        %v1338 = vunpack.c.h.b16 %v506
        %v1339 = vunpack.c.l.b16 %v507
        %v1340 = vunpack.c.h.b16 %v507
        %v1341 = vunpack.c.l.b16 %v508
        %v1342 = vunpack.c.h.b16 %v508
        %v1343 = vunpack.c.l.b16 %v509
        %v1344 = vunpack.c.h.b16 %v509
        %v1345 = vunpack.c.l.b16 %v510
        %v1346 = vunpack.c.h.b16 %v510
        %v1347 = vunpack.c.l.b16 %v511
        %v1348 = vunpack.c.h.b16 %v511
        %v1349 = vunpack.c.l.b16 %v512
        %v1350 = vunpack.c.h.b16 %v512
        %v1351 = vunpack.c.l.b16 %v513
        %v1352 = vunpack.c.h.b16 %v513
        %v1353 = vunpack.c.l.b16 %v514
        %v1354 = vunpack.c.h.b16 %v514
        %v1355 = vunpack.c.l.b16 %v515
        %v1356 = vunpack.c.h.b16 %v515
        %v1357 = vunpack.c.l.b16 %v516
        %v1358 = vunpack.c.h.b16 %v516
        %v1359 = vunpack.c.l.b16 %v517
        %v1360 = vunpack.c.h.b16 %v517
        %v1361 = vunpack.c.l.b16 %v518
        %v1362 = vunpack.c.h.b16 %v518
        %v1363 = vunpack.c.l.b16 %v519
        %v1364 = vunpack.c.h.b16 %v519
        %v1365 = vunpack.c.l.b16 %v520
        %v1366 = vunpack.c.h.b16 %v520
        %v1367 = vunpack.c.l.b16 %v521
        %v1368 = vunpack.c.h.b16 %v521
        %v1369 = vunpack.c.l.b16 %v522
        %v1370 = vunpack.c.h.b16 %v522
        %v1371 = vunpack.c.l.b16 %v523
        %v1372 = vunpack.c.h.b16 %v523
        %v1373 = vunpack.c.l.b16 %v524
        %v1374 = vunpack.c.h.b16 %v524
        %v1375 = vunpack.c.l.b16 %v525
        %v1376 = vunpack.c.h.b16 %v525
        %v1377 = vunpack.c.l.b16 %v526
        %v1378 = vunpack.c.h.b16 %v526
        %v1379 = vunpack.c.l.b16 %v527
        %v1380 = vunpack.c.h.b16 %v527
        %v1381 = vunpack.c.l.b16 %v528
        %v1382 = vunpack.c.h.b16 %v528
        %v1383 = vunpack.c.l.b16 %v529
        %v1384 = vunpack.c.h.b16 %v529
        %v1385 = vunpack.c.l.b16 %v530
        %v1386 = vunpack.c.h.b16 %v530
        %v1387 = vunpack.c.l.b16 %v531
        %v1388 = vunpack.c.h.b16 %v531
        %v1389 = vunpack.c.l.b16 %v532
        %v1390 = vunpack.c.h.b16 %v532
        %v1391 = vunpack.c.l.b16 %v533
        %v1392 = vunpack.c.h.b16 %v533
        %v1393 = vunpack.c.l.b16 %v534
        %v1394 = vunpack.c.h.b16 %v534
        %v1395 = vunpack.c.l.b16 %v535
        %v1396 = vunpack.c.h.b16 %v535
        %v1397 = vunpack.c.l.b16 %v536
        %v1398 = vunpack.c.h.b16 %v536
        %v1399 = vunpack.c.l.b16 %v537
        %v1400 = vunpack.c.h.b16 %v537
        %v1401 = vunpack.c.l.b16 %v538
        %v1402 = vunpack.c.h.b16 %v538
        %v1403 = vunpack.c.l.b16 %v539
        %v1404 = vunpack.c.h.b16 %v539
        %v1405 = vunpack.c.l.b16 %v540
        %v1406 = vunpack.c.h.b16 %v540
        %v1407 = vunpack.c.l.b16 %v541
        %v1408 = vunpack.c.h.b16 %v541
        %v1409 = vunpack.c.l.b16 %v542
        %v1410 = vunpack.c.h.b16 %v542
        %v1411 = vunpack.c.l.b16 %v543
        %v1412 = vunpack.c.h.b16 %v543
        %v1413 = vunpack.c.l.b16 %v544
        %v1414 = vunpack.c.h.b16 %v544
        %v1415 = vunpack.c.l.b16 %v545
        %v1416 = vunpack.c.h.b16 %v545
        %v1417 = vpack.c.b16 %v859, %v841
        %v1418 = vpack.c.b16 %v860, %v842
        %v1419 = vpack.c.b16 %v861, %v843
        %v1420 = vpack.c.b16 %v862, %v844
        %v1421 = vpack.c.b16 %v863, %v845
        %v1422 = vpack.c.b16 %v864, %v846
        %v1423 = vpack.c.b16 %v865, %v847
        %v1424 = vpack.c.b16 %v866, %v848
        %v1425 = vpack.c.b16 %v867, %v849
        %v1426 = vpack.c.b16 %v868, %v850
        %v1427 = vpack.c.b16 %v869, %v851
        %v1428 = vpack.c.b16 %v870, %v852
        %v1429 = vpack.c.b16 %v871, %v853
        %v1430 = vpack.c.b16 %v872, %v854
        %v1431 = vpack.c.b16 %v873, %v855
        %v1432 = vpack.c.b16 %v874, %v856
        %v1433 = vpack.c.b16 %v875, %v857
        %v1434 = vpack.c.b16 %v876, %v858
        %v1435 = vpack.c.b16 %v895, %v877
        %v1436 = vpack.c.b16 %v896, %v878
        %v1437 = vpack.c.b16 %v897, %v879
        %v1438 = vpack.c.b16 %v898, %v880
        %v1439 = vpack.c.b16 %v899, %v881
        %v1440 = vpack.c.b16 %v900, %v882
        %v1441 = vpack.c.b16 %v901, %v883
        %v1442 = vpack.c.b16 %v902, %v884
        %v1443 = vpack.c.b16 %v903, %v885
        %v1444 = vpack.c.b16 %v904, %v886
        %v1445 = vpack.c.b16 %v905, %v887
        %v1446 = vpack.c.b16 %v906, %v888
        %v1447 = vpack.c.b16 %v907, %v889
        %v1448 = vpack.c.b16 %v908, %v890
        %v1449 = vpack.c.b16 %v909, %v891
        %v1450 = vpack.c.b16 %v910, %v892
        %v1451 = vpack.c.b16 %v911, %v893
        %v1452 = vpack.c.b16 %v912, %v894
        %v1453 = vpack.c.b16 %v931, %v913
        %v1454 = vpack.c.b16 %v932, %v914
        %v1455 = vpack.c.b16 %v933, %v915
        %v1456 = vpack.c.b16 %v934, %v916
        %v1457 = vpack.c.b16 %v935, %v917
        %v1458 = vpack.c.b16 %v936, %v918
        %v1459 = vpack.c.b16 %v937, %v919
        %v1460 = vpack.c.b16 %v938, %v920
        %v1461 = vpack.c.b16 %v939, %v921
        %v1462 = vpack.c.b16 %v940, %v922
        %v1463 = vpack.c.b16 %v941, %v923
        %v1464 = vpack.c.b16 %v942, %v924
        %v1465 = vpack.c.b16 %v943, %v925
        %v1466 = vpack.c.b16 %v944, %v926
        %v1467 = vpack.c.b16 %v945, %v927
        %v1468 = vpack.c.b16 %v946, %v928
        %v1469 = vpack.c.b16 %v947, %v929
        %v1470 = vpack.c.b16 %v948, %v930
        %v1471 = vpack.c.b16 %v967, %v949
        %v1472 = vpack.c.b16 %v968, %v950
        %v1473 = vpack.c.b16 %v969, %v951
        %v1474 = vpack.c.b16 %v970, %v952
        %v1475 = vpack.c.b16 %v971, %v953
        %v1476 = vpack.c.b16 %v972, %v954
        %v1477 = vpack.c.b16 %v973, %v955
        %v1478 = vpack.c.b16 %v974, %v956
        %v1479 = vpack.c.b16 %v975, %v957
        %v1480 = vpack.c.b16 %v976, %v958
        %v1481 = vpack.c.b16 %v977, %v959
        %v1482 = vpack.c.b16 %v978, %v960
        %v1483 = vpack.c.b16 %v979, %v961
        %v1484 = vpack.c.b16 %v980, %v962
        %v1485 = vpack.c.b16 %v981, %v963
        %v1486 = vpack.c.b16 %v982, %v964
        %v1487 = vpack.c.b16 %v983, %v965
        %v1488 = vpack.c.b16 %v984, %v966
        %v1489 = vpack.c.b16 %v1003, %v985
        %v1490 = vpack.c.b16 %v1004, %v986
        %v1491 = vpack.c.b16 %v1005, %v987
        %v1492 = vpack.c.b16 %v1006, %v988
        %v1493 = vpack.c.b16 %v1007, %v989
        %v1494 = vpack.c.b16 %v1008, %v990
        %v1495 = vpack.c.b16 %v1009, %v991
        %v1496 = vpack.c.b16 %v1010, %v992
        %v1497 = vpack.c.b16 %v1011, %v993
        %v1498 = vpack.c.b16 %v1012, %v994
        %v1499 = vpack.c.b16 %v1013, %v995
        %v1500 = vpack.c.b16 %v1014, %v996
        %v1501 = vpack.c.b16 %v1015, %v997
        %v1502 = vpack.c.b16 %v1016, %v998
        %v1503 = vpack.c.b16 %v1017, %v999
        %v1504 = vpack.c.b16 %v1018, %v1000
        %v1505 = vpack.c.b16 %v1019, %v1001
        %v1506 = vpack.c.b16 %v1020, %v1002
        %v1507 = vpack.c.b16 %v1039, %v1021
        %v1508 = vpack.c.b16 %v1040, %v1022
        %v1509 = vpack.c.b16 %v1041, %v1023
        %v1510 = vpack.c.b16 %v1042, %v1024
        %v1511 = vpack.c.b16 %v1043, %v1025
        %v1512 = vpack.c.b16 %v1044, %v1026
        %v1513 = vpack.c.b16 %v1045, %v1027
        %v1514 = vpack.c.b16 %v1046, %v1028
        %v1515 = vpack.c.b16 %v1047, %v1029
        %v1516 = vpack.c.b16 %v1048, %v1030
        %v1517 = vpack.c.b16 %v1049, %v1031
        %v1518 = vpack.c.b16 %v1050, %v1032
        %v1519 = vpack.c.b16 %v1051, %v1033
        %v1520 = vpack.c.b16 %v1052, %v1034
        %v1521 = vpack.c.b16 %v1053, %v1035
        %v1522 = vpack.c.b16 %v1054, %v1036
        %v1523 = vpack.c.b16 %v1055, %v1037
        %v1524 = vpack.c.b16 %v1056, %v1038
        %v1525 = vpack.c.b16 %v1075, %v1057
        %v1526 = vpack.c.b16 %v1076, %v1058
        %v1527 = vpack.c.b16 %v1077, %v1059
        %v1528 = vpack.c.b16 %v1078, %v1060
        %v1529 = vpack.c.b16 %v1079, %v1061
        %v1530 = vpack.c.b16 %v1080, %v1062
        %v1531 = vpack.c.b16 %v1081, %v1063
        %v1532 = vpack.c.b16 %v1082, %v1064
        %v1533 = vpack.c.b16 %v1083, %v1065
        %v1534 = vpack.c.b16 %v1084, %v1066
        %v1535 = vpack.c.b16 %v1085, %v1067
        %v1536 = vpack.c.b16 %v1086, %v1068
        %v1537 = vpack.c.b16 %v1087, %v1069
        %v1538 = vpack.c.b16 %v1088, %v1070
        %v1539 = vpack.c.b16 %v1089, %v1071
        %v1540 = vpack.c.b16 %v1090, %v1072
        %v1541 = vpack.c.b16 %v1091, %v1073
        %v1542 = vpack.c.b16 %v1092, %v1074
        %v1543 = vpack.c.b16 %v1111, %v1093
        %v1544 = vpack.c.b16 %v1112, %v1094
        %v1545 = vpack.c.b16 %v1113, %v1095
        %v1546 = vpack.c.b16 %v1114, %v1096
        %v1547 = vpack.c.b16 %v1115, %v1097
        %v1548 = vpack.c.b16 %v1116, %v1098
        %v1549 = vpack.c.b16 %v1117, %v1099
        %v1550 = vpack.c.b16 %v1118, %v1100
        %v1551 = vpack.c.b16 %v1119, %v1101
        %v1552 = vpack.c.b16 %v1120, %v1102
        %v1553 = vpack.c.b16 %v1121, %v1103
        %v1554 = vpack.c.b16 %v1122, %v1104
        %v1555 = vpack.c.b16 %v1123, %v1105
        %v1556 = vpack.c.b16 %v1124, %v1106
        %v1557 = vpack.c.b16 %v1125, %v1107
        %v1558 = vpack.c.b16 %v1126, %v1108
        %v1559 = vpack.c.b16 %v1127, %v1109
        %v1560 = vpack.c.b16 %v1128, %v1110
        %v1561 = vpack.c.b16 %v1147, %v1129
        %v1562 = vpack.c.b16 %v1148, %v1130
        %v1563 = vpack.c.b16 %v1149, %v1131
        %v1564 = vpack.c.b16 %v1150, %v1132
        %v1565 = vpack.c.b16 %v1151, %v1133
        %v1566 = vpack.c.b16 %v1152, %v1134
        %v1567 = vpack.c.b16 %v1153, %v1135
        %v1568 = vpack.c.b16 %v1154, %v1136
        %v1569 = vpack.c.b16 %v1155, %v1137
        %v1570 = vpack.c.b16 %v1156, %v1138
        %v1571 = vpack.c.b16 %v1157, %v1139
        %v1572 = vpack.c.b16 %v1158, %v1140
        %v1573 = vpack.c.b16 %v1159, %v1141
        %v1574 = vpack.c.b16 %v1160, %v1142
        %v1575 = vpack.c.b16 %v1161, %v1143
        %v1576 = vpack.c.b16 %v1162, %v1144
        %v1577 = vpack.c.b16 %v1163, %v1145
        %v1578 = vpack.c.b16 %v1164, %v1146
        %v1579 = vpack.c.b16 %v1183, %v1165
        %v1580 = vpack.c.b16 %v1184, %v1166
        %v1581 = vpack.c.b16 %v1185, %v1167
        %v1582 = vpack.c.b16 %v1186, %v1168
        %v1583 = vpack.c.b16 %v1187, %v1169
        %v1584 = vpack.c.b16 %v1188, %v1170
        %v1585 = vpack.c.b16 %v1189, %v1171
        %v1586 = vpack.c.b16 %v1190, %v1172
        %v1587 = vpack.c.b16 %v1191, %v1173
        %v1588 = vpack.c.b16 %v1192, %v1174
        %v1589 = vpack.c.b16 %v1193, %v1175
        %v1590 = vpack.c.b16 %v1194, %v1176
        %v1591 = vpack.c.b16 %v1195, %v1177
        %v1592 = vpack.c.b16 %v1196, %v1178
        %v1593 = vpack.c.b16 %v1197, %v1179
        %v1594 = vpack.c.b16 %v1198, %v1180
        %v1595 = vpack.c.b16 %v1199, %v1181
        %v1596 = vpack.c.b16 %v1200, %v1182
        %v1597 = vpack.c.b16 %v1219, %v1201
        %v1598 = vpack.c.b16 %v1220, %v1202
        %v1599 = vpack.c.b16 %v1221, %v1203
        %v1600 = vpack.c.b16 %v1222, %v1204
        %v1601 = vpack.c.b16 %v1223, %v1205
        %v1602 = vpack.c.b16 %v1224, %v1206
        %v1603 = vpack.c.b16 %v1225, %v1207
        %v1604 = vpack.c.b16 %v1226, %v1208
        %v1605 = vpack.c.b16 %v1227, %v1209
        %v1606 = vpack.c.b16 %v1228, %v1210
        %v1607 = vpack.c.b16 %v1229, %v1211
        %v1608 = vpack.c.b16 %v1230, %v1212
        %v1609 = vpack.c.b16 %v1231, %v1213
        %v1610 = vpack.c.b16 %v1232, %v1214
        %v1611 = vpack.c.b16 %v1233, %v1215
        %v1612 = vpack.c.b16 %v1234, %v1216
        %v1613 = vpack.c.b16 %v1235, %v1217
        %v1614 = vpack.c.b16 %v1236, %v1218
        %v1615 = vpack.c.b16 %v1255, %v1237
        %v1616 = vpack.c.b16 %v1256, %v1238
        %v1617 = vpack.c.b16 %v1257, %v1239
        %v1618 = vpack.c.b16 %v1258, %v1240
        %v1619 = vpack.c.b16 %v1259, %v1241
        %v1620 = vpack.c.b16 %v1260, %v1242
        %v1621 = vpack.c.b16 %v1261, %v1243
        %v1622 = vpack.c.b16 %v1262, %v1244
        %v1623 = vpack.c.b16 %v1263, %v1245
        %v1624 = vpack.c.b16 %v1264, %v1246
        %v1625 = vpack.c.b16 %v1265, %v1247
        %v1626 = vpack.c.b16 %v1266, %v1248
        %v1627 = vpack.c.b16 %v1267, %v1249
        %v1628 = vpack.c.b16 %v1268, %v1250
        %v1629 = vpack.c.b16 %v1269, %v1251
        %v1630 = vpack.c.b16 %v1270, %v1252
        %v1631 = vpack.c.b16 %v1271, %v1253
        %v1632 = vpack.c.b16 %v1272, %v1254
        %v1633 = vpack.c.b16 %v1291, %v1273
        %v1634 = vpack.c.b16 %v1292, %v1274
        %v1635 = vpack.c.b16 %v1293, %v1275
        %v1636 = vpack.c.b16 %v1294, %v1276
        %v1637 = vpack.c.b16 %v1295, %v1277
        %v1638 = vpack.c.b16 %v1296, %v1278
        %v1639 = vpack.c.b16 %v1297, %v1279
        %v1640 = vpack.c.b16 %v1298, %v1280
        %v1641 = vpack.c.b16 %v1299, %v1281
        %v1642 = vpack.c.b16 %v1300, %v1282
        %v1643 = vpack.c.b16 %v1301, %v1283
        %v1644 = vpack.c.b16 %v1302, %v1284
        %v1645 = vpack.c.b16 %v1303, %v1285
        %v1646 = vpack.c.b16 %v1304, %v1286
        %v1647 = vpack.c.b16 %v1305, %v1287
        %v1648 = vpack.c.b16 %v1306, %v1288
        %v1649 = vpack.c.b16 %v1307, %v1289
        %v1650 = vpack.c.b16 %v1308, %v1290
        %v1651 = vpack.c.b16 %v1327, %v1309
        %v1652 = vpack.c.b16 %v1328, %v1310
        %v1653 = vpack.c.b16 %v1329, %v1311
        %v1654 = vpack.c.b16 %v1330, %v1312
        %v1655 = vpack.c.b16 %v1331, %v1313
        %v1656 = vpack.c.b16 %v1332, %v1314
        %v1657 = vpack.c.b16 %v1333, %v1315
        %v1658 = vpack.c.b16 %v1334, %v1316
        %v1659 = vpack.c.b16 %v1335, %v1317
        %v1660 = vpack.c.b16 %v1336, %v1318
        %v1661 = vpack.c.b16 %v1337, %v1319
        %v1662 = vpack.c.b16 %v1338, %v1320
        %v1663 = vpack.c.b16 %v1339, %v1321
        %v1664 = vpack.c.b16 %v1340, %v1322
        %v1665 = vpack.c.b16 %v1341, %v1323
        %v1666 = vpack.c.b16 %v1342, %v1324
        %v1667 = vpack.c.b16 %v1343, %v1325
        %v1668 = vpack.c.b16 %v1344, %v1326
        %v1669 = vpack.c.b16 %v1363, %v1345
        %v1670 = vpack.c.b16 %v1364, %v1346
        %v1671 = vpack.c.b16 %v1365, %v1347
        %v1672 = vpack.c.b16 %v1366, %v1348
        %v1673 = vpack.c.b16 %v1367, %v1349
        %v1674 = vpack.c.b16 %v1368, %v1350
        %v1675 = vpack.c.b16 %v1369, %v1351
        %v1676 = vpack.c.b16 %v1370, %v1352
        %v1677 = vpack.c.b16 %v1371, %v1353
        %v1678 = vpack.c.b16 %v1372, %v1354
        %v1679 = vpack.c.b16 %v1373, %v1355
        %v1680 = vpack.c.b16 %v1374, %v1356
        %v1681 = vpack.c.b16 %v1375, %v1357
        %v1682 = vpack.c.b16 %v1376, %v1358
        %v1683 = vpack.c.b16 %v1377, %v1359
        %v1684 = vpack.c.b16 %v1378, %v1360
        %v1685 = vpack.c.b16 %v1379, %v1361
        %v1686 = vpack.c.b16 %v1380, %v1362
        %v1687 = vpack.c.b16 %v1399, %v1381
        %v1688 = vpack.c.b16 %v1400, %v1382
        %v1689 = vpack.c.b16 %v1401, %v1383
        %v1690 = vpack.c.b16 %v1402, %v1384
        %v1691 = vpack.c.b16 %v1403, %v1385
        %v1692 = vpack.c.b16 %v1404, %v1386
        %v1693 = vpack.c.b16 %v1405, %v1387
        %v1694 = vpack.c.b16 %v1406, %v1388
        %v1695 = vpack.c.b16 %v1407, %v1389
        %v1696 = vpack.c.b16 %v1408, %v1390
        %v1697 = vpack.c.b16 %v1409, %v1391
        %v1698 = vpack.c.b16 %v1410, %v1392
        %v1699 = vpack.c.b16 %v1411, %v1393
        %v1700 = vpack.c.b16 %v1412, %v1394
        %v1701 = vpack.c.b16 %v1413, %v1395
        %v1702 = vpack.c.b16 %v1414, %v1396
        %v1703 = vpack.c.b16 %v1415, %v1397
        %v1704 = vpack.c.b16 %v1416, %v1398
        %1993 = vmatprep.subr.bf16.mxu0 %v1418
        %1994 = vmatpush1.bf16.msra.mxu0 %v1417
        %1995 = vmatprep.subr.bf16.mxu0 %v1436
        %1996 = vmatpush1.bf16.msra.mxu0 %v1435
        %1997 = vmatprep.subr.bf16.mxu0 %v1454
        %1998 = vmatpush1.bf16.msra.mxu0 %v1453
        %1999 = vmatprep.subr.bf16.mxu0 %v1472
        %2000 = vmatpush1.bf16.msra.mxu0 %v1471
        %2001 = vmatprep.subr.bf16.mxu0 %v1490
        %2002 = vmatpush1.bf16.msra.mxu0 %v1489
        %2003 = vmatprep.subr.bf16.mxu0 %v1508
        %2004 = vmatpush1.bf16.msra.mxu0 %v1507
        %2005 = vmatprep.subr.bf16.mxu0 %v1526
        %2006 = vmatpush1.bf16.msra.mxu0 %v1525
        %2007 = vmatprep.subr.bf16.mxu0 %v1544
        %2008 = vmatpush1.bf16.msra.mxu0 %v1543
        %2009 = vmatprep.subr.bf16.mxu0 %v1562
        %2010 = vmatpush1.bf16.msra.mxu0 %v1561
        %2011 = vmatprep.subr.bf16.mxu0 %v1580
        %2012 = vmatpush1.bf16.msra.mxu0 %v1579
        %2013 = vmatprep.subr.bf16.mxu0 %v1598
        %2014 = vmatpush1.bf16.msra.mxu0 %v1597
        %2015 = vmatprep.subr.bf16.mxu0 %v1616
        %2016 = vmatpush1.bf16.msra.mxu0 %v1615
        %2017 = vmatprep.subr.bf16.mxu0 %v1634
        %2018 = vmatpush1.bf16.msra.mxu0 %v1633
        %2019 = vmatprep.subr.bf16.mxu0 %v1652
        %2020 = vmatpush1.bf16.msra.mxu0 %v1651
        %2021 = vmatprep.subr.bf16.mxu0 %v1670
        %2022 = vmatpush1.bf16.msra.mxu0 %v1669
        %2023 = vmatprep.subr.bf16.mxu0 %v1688
        %2024 = vmatpush1.bf16.msra.mxu0 %v1687
        %2025 = vmatprep.mubr.bf16.mxu0 %v550
        %2026 = vmatmul.mubr.bf16.gmra.mrb[0].mxu0 %v549
        %v2027 = vpop.f32.mrb[0].mxu0
        %v2028 = vadd.f32 0.0, %v2027
        %v2029 = vpop.f32.mrb[0].mxu0
        %v2030 = vadd.f32 0.0, %v2029
        %v2031 = vpop.f32.mrb[0].mxu0
        %v2032 = vpop.f32.mrb[0].mxu0
        %2033 = vdwg.mxu0
        %2034 = vmatprep.subr.bf16.mxu0 %v1420
        %2035 = vmatpush1.bf16.msra.mxu0 %v1419
        %2036 = vmatprep.subr.bf16.mxu0 %v1438
        %2037 = vmatpush1.bf16.msra.mxu0 %v1437
        %2038 = vmatprep.subr.bf16.mxu0 %v1456
        %2039 = vmatpush1.bf16.msra.mxu0 %v1455
        %2040 = vmatprep.subr.bf16.mxu0 %v1474
        %2041 = vmatpush1.bf16.msra.mxu0 %v1473
        %2042 = vmatprep.subr.bf16.mxu0 %v1492
        %2043 = vmatpush1.bf16.msra.mxu0 %v1491
        %2044 = vmatprep.subr.bf16.mxu0 %v1510
        %2045 = vmatpush1.bf16.msra.mxu0 %v1509
        %2046 = vmatprep.subr.bf16.mxu0 %v1528
        %2047 = vmatpush1.bf16.msra.mxu0 %v1527
        %2048 = vmatprep.subr.bf16.mxu0 %v1546
        %2049 = vmatpush1.bf16.msra.mxu0 %v1545
        %2050 = vmatprep.subr.bf16.mxu0 %v1564
        %2051 = vmatpush1.bf16.msra.mxu0 %v1563
        %2052 = vmatprep.subr.bf16.mxu0 %v1582
        %2053 = vmatpush1.bf16.msra.mxu0 %v1581
        %2054 = vmatprep.subr.bf16.mxu0 %v1600
        %2055 = vmatpush1.bf16.msra.mxu0 %v1599
        %2056 = vmatprep.subr.bf16.mxu0 %v1618
        %2057 = vmatpush1.bf16.msra.mxu0 %v1617
        %2058 = vmatprep.subr.bf16.mxu0 %v1636
        %2059 = vmatpush1.bf16.msra.mxu0 %v1635
        %2060 = vmatprep.subr.bf16.mxu0 %v1654
        %2061 = vmatpush1.bf16.msra.mxu0 %v1653
        %2062 = vmatprep.subr.bf16.mxu0 %v1672
        %2063 = vmatpush1.bf16.msra.mxu0 %v1671
        %2064 = vmatprep.subr.bf16.mxu0 %v1690
        %2065 = vmatpush1.bf16.msra.mxu0 %v1689
        %2066 = vmatprep.mubr.bf16.mxu0 %v550
        %2067 = vmatmul.mubr.bf16.gmra.mrb[0].mxu0 %v549
        %v2068 = vpop.f32.mrb[0].mxu0
        %v2069 = vadd.f32 0.0, %v2068
        %v2070 = vpop.f32.mrb[0].mxu0
        %v2071 = vadd.f32 0.0, %v2070
        %v2072 = vpop.f32.mrb[0].mxu0
        %v2073 = vpop.f32.mrb[0].mxu0
        %2074 = vdwg.mxu0
        %2075 = vmatprep.subr.bf16.mxu0 %v1422
        %2076 = vmatpush1.bf16.msra.mxu0 %v1421
        %2077 = vmatprep.subr.bf16.mxu0 %v1440
        %2078 = vmatpush1.bf16.msra.mxu0 %v1439
        %2079 = vmatprep.subr.bf16.mxu0 %v1458
        %2080 = vmatpush1.bf16.msra.mxu0 %v1457
        %2081 = vmatprep.subr.bf16.mxu0 %v1476
        %2082 = vmatpush1.bf16.msra.mxu0 %v1475
        %2083 = vmatprep.subr.bf16.mxu0 %v1494
        %2084 = vmatpush1.bf16.msra.mxu0 %v1493
        %2085 = vmatprep.subr.bf16.mxu0 %v1512
        %2086 = vmatpush1.bf16.msra.mxu0 %v1511
        %2087 = vmatprep.subr.bf16.mxu0 %v1530
        %2088 = vmatpush1.bf16.msra.mxu0 %v1529
        %2089 = vmatprep.subr.bf16.mxu0 %v1548
        %2090 = vmatpush1.bf16.msra.mxu0 %v1547
        %2091 = vmatprep.subr.bf16.mxu0 %v1566
        %2092 = vmatpush1.bf16.msra.mxu0 %v1565
        %2093 = vmatprep.subr.bf16.mxu0 %v1584
        %2094 = vmatpush1.bf16.msra.mxu0 %v1583
        %2095 = vmatprep.subr.bf16.mxu0 %v1602
        %2096 = vmatpush1.bf16.msra.mxu0 %v1601
        %2097 = vmatprep.subr.bf16.mxu0 %v1620
        %2098 = vmatpush1.bf16.msra.mxu0 %v1619
        %2099 = vmatprep.subr.bf16.mxu0 %v1638
        %2100 = vmatpush1.bf16.msra.mxu0 %v1637
        %2101 = vmatprep.subr.bf16.mxu0 %v1656
        %2102 = vmatpush1.bf16.msra.mxu0 %v1655
        %2103 = vmatprep.subr.bf16.mxu0 %v1674
        %2104 = vmatpush1.bf16.msra.mxu0 %v1673
        %2105 = vmatprep.subr.bf16.mxu0 %v1692
        %2106 = vmatpush1.bf16.msra.mxu0 %v1691
        %2107 = vmatprep.mubr.bf16.mxu0 %v550
        %2108 = vmatmul.mubr.bf16.gmra.mrb[0].mxu0 %v549
        %v2109 = vpop.f32.mrb[0].mxu0
        %v2110 = vadd.f32 0.0, %v2109
        %v2111 = vpop.f32.mrb[0].mxu0
        %v2112 = vadd.f32 0.0, %v2111
        %v2113 = vpop.f32.mrb[0].mxu0
        %v2114 = vpop.f32.mrb[0].mxu0
        %2115 = vdwg.mxu0
        %2116 = vmatprep.subr.bf16.mxu0 %v1424
        %2117 = vmatpush1.bf16.msra.mxu0 %v1423
        %2118 = vmatprep.subr.bf16.mxu0 %v1442
        %2119 = vmatpush1.bf16.msra.mxu0 %v1441
        %2120 = vmatprep.subr.bf16.mxu0 %v1460
        %2121 = vmatpush1.bf16.msra.mxu0 %v1459
        %2122 = vmatprep.subr.bf16.mxu0 %v1478
        %2123 = vmatpush1.bf16.msra.mxu0 %v1477
        %2124 = vmatprep.subr.bf16.mxu0 %v1496
        %2125 = vmatpush1.bf16.msra.mxu0 %v1495
        %2126 = vmatprep.subr.bf16.mxu0 %v1514
        %2127 = vmatpush1.bf16.msra.mxu0 %v1513
        %2128 = vmatprep.subr.bf16.mxu0 %v1532
        %2129 = vmatpush1.bf16.msra.mxu0 %v1531
        %2130 = vmatprep.subr.bf16.mxu0 %v1550
        %2131 = vmatpush1.bf16.msra.mxu0 %v1549
        %2132 = vmatprep.subr.bf16.mxu0 %v1568
        %2133 = vmatpush1.bf16.msra.mxu0 %v1567
        %2134 = vmatprep.subr.bf16.mxu0 %v1586
        %2135 = vmatpush1.bf16.msra.mxu0 %v1585
        %2136 = vmatprep.subr.bf16.mxu0 %v1604
        %2137 = vmatpush1.bf16.msra.mxu0 %v1603
        %2138 = vmatprep.subr.bf16.mxu0 %v1622
        %2139 = vmatpush1.bf16.msra.mxu0 %v1621
        %2140 = vmatprep.subr.bf16.mxu0 %v1640
        %2141 = vmatpush1.bf16.msra.mxu0 %v1639
        %2142 = vmatprep.subr.bf16.mxu0 %v1658
        %2143 = vmatpush1.bf16.msra.mxu0 %v1657
        %2144 = vmatprep.subr.bf16.mxu0 %v1676
        %2145 = vmatpush1.bf16.msra.mxu0 %v1675
        %2146 = vmatprep.subr.bf16.mxu0 %v1694
        %2147 = vmatpush1.bf16.msra.mxu0 %v1693
        %2148 = vmatprep.mubr.bf16.mxu0 %v550
        %2149 = vmatmul.mubr.bf16.gmra.mrb[0].mxu0 %v549
        %v2150 = vpop.f32.mrb[0].mxu0
        %v2151 = vadd.f32 0.0, %v2150
        %v2152 = vpop.f32.mrb[0].mxu0
        %v2153 = vadd.f32 0.0, %v2152
        %v2154 = vpop.f32.mrb[0].mxu0
        %v2155 = vpop.f32.mrb[0].mxu0
        %2156 = vdwg.mxu0
        %2157 = vmatprep.subr.bf16.mxu0 %v1426
        %2158 = vmatpush1.bf16.msra.mxu0 %v1425
        %2159 = vmatprep.subr.bf16.mxu0 %v1444
        %2160 = vmatpush1.bf16.msra.mxu0 %v1443
        %2161 = vmatprep.subr.bf16.mxu0 %v1462
        %2162 = vmatpush1.bf16.msra.mxu0 %v1461
        %2163 = vmatprep.subr.bf16.mxu0 %v1480
        %2164 = vmatpush1.bf16.msra.mxu0 %v1479
        %2165 = vmatprep.subr.bf16.mxu0 %v1498
        %2166 = vmatpush1.bf16.msra.mxu0 %v1497
        %2167 = vmatprep.subr.bf16.mxu0 %v1516
        %2168 = vmatpush1.bf16.msra.mxu0 %v1515
        %2169 = vmatprep.subr.bf16.mxu0 %v1534
        %2170 = vmatpush1.bf16.msra.mxu0 %v1533
        %2171 = vmatprep.subr.bf16.mxu0 %v1552
        %2172 = vmatpush1.bf16.msra.mxu0 %v1551
        %2173 = vmatprep.subr.bf16.mxu0 %v1570
        %2174 = vmatpush1.bf16.msra.mxu0 %v1569
        %2175 = vmatprep.subr.bf16.mxu0 %v1588
        %2176 = vmatpush1.bf16.msra.mxu0 %v1587
        %2177 = vmatprep.subr.bf16.mxu0 %v1606
        %2178 = vmatpush1.bf16.msra.mxu0 %v1605
        %2179 = vmatprep.subr.bf16.mxu0 %v1624
        %2180 = vmatpush1.bf16.msra.mxu0 %v1623
        %2181 = vmatprep.subr.bf16.mxu0 %v1642
        %2182 = vmatpush1.bf16.msra.mxu0 %v1641
        %2183 = vmatprep.subr.bf16.mxu0 %v1660
        %2184 = vmatpush1.bf16.msra.mxu0 %v1659
        %2185 = vmatprep.subr.bf16.mxu0 %v1678
        %2186 = vmatpush1.bf16.msra.mxu0 %v1677
        %2187 = vmatprep.subr.bf16.mxu0 %v1696
        %2188 = vmatpush1.bf16.msra.mxu0 %v1695
        %2189 = vmatprep.mubr.bf16.mxu0 %v550
        %2190 = vmatmul.mubr.bf16.gmra.mrb[0].mxu0 %v549
        %v2191 = vpop.f32.mrb[0].mxu0
        %v2192 = vadd.f32 0.0, %v2191
        %v2193 = vpop.f32.mrb[0].mxu0
        %v2194 = vadd.f32 0.0, %v2193
        %v2195 = vpop.f32.mrb[0].mxu0
        %v2196 = vpop.f32.mrb[0].mxu0
        %2197 = vdwg.mxu0
        %2198 = vmatprep.subr.bf16.mxu0 %v1428
        %2199 = vmatpush1.bf16.msra.mxu0 %v1427
        %2200 = vmatprep.subr.bf16.mxu0 %v1446
        %2201 = vmatpush1.bf16.msra.mxu0 %v1445
        %2202 = vmatprep.subr.bf16.mxu0 %v1464
        %2203 = vmatpush1.bf16.msra.mxu0 %v1463
        %2204 = vmatprep.subr.bf16.mxu0 %v1482
        %2205 = vmatpush1.bf16.msra.mxu0 %v1481
        %2206 = vmatprep.subr.bf16.mxu0 %v1500
        %2207 = vmatpush1.bf16.msra.mxu0 %v1499
        %2208 = vmatprep.subr.bf16.mxu0 %v1518
        %2209 = vmatpush1.bf16.msra.mxu0 %v1517
        %2210 = vmatprep.subr.bf16.mxu0 %v1536
        %2211 = vmatpush1.bf16.msra.mxu0 %v1535
        %2212 = vmatprep.subr.bf16.mxu0 %v1554
        %2213 = vmatpush1.bf16.msra.mxu0 %v1553
        %2214 = vmatprep.subr.bf16.mxu0 %v1572
        %2215 = vmatpush1.bf16.msra.mxu0 %v1571
        %2216 = vmatprep.subr.bf16.mxu0 %v1590
        %2217 = vmatpush1.bf16.msra.mxu0 %v1589
        %2218 = vmatprep.subr.bf16.mxu0 %v1608
        %2219 = vmatpush1.bf16.msra.mxu0 %v1607
        %2220 = vmatprep.subr.bf16.mxu0 %v1626
        %2221 = vmatpush1.bf16.msra.mxu0 %v1625
        %2222 = vmatprep.subr.bf16.mxu0 %v1644
        %2223 = vmatpush1.bf16.msra.mxu0 %v1643
        %2224 = vmatprep.subr.bf16.mxu0 %v1662
        %2225 = vmatpush1.bf16.msra.mxu0 %v1661
        %2226 = vmatprep.subr.bf16.mxu0 %v1680
        %2227 = vmatpush1.bf16.msra.mxu0 %v1679
        %2228 = vmatprep.subr.bf16.mxu0 %v1698
        %2229 = vmatpush1.bf16.msra.mxu0 %v1697
        %2230 = vmatprep.mubr.bf16.mxu0 %v550
        %2231 = vmatmul.mubr.bf16.gmra.mrb[0].mxu0 %v549
        %v2232 = vpop.f32.mrb[0].mxu0
        %v2233 = vadd.f32 0.0, %v2232
        %v2234 = vpop.f32.mrb[0].mxu0
        %v2235 = vadd.f32 0.0, %v2234
        %v2236 = vpop.f32.mrb[0].mxu0
        %v2237 = vpop.f32.mrb[0].mxu0
        %2238 = vdwg.mxu0
        %2239 = vmatprep.subr.bf16.mxu0 %v1430
        %2240 = vmatpush1.bf16.msra.mxu0 %v1429
        %2241 = vmatprep.subr.bf16.mxu0 %v1448
        %2242 = vmatpush1.bf16.msra.mxu0 %v1447
        %2243 = vmatprep.subr.bf16.mxu0 %v1466
        %2244 = vmatpush1.bf16.msra.mxu0 %v1465
        %2245 = vmatprep.subr.bf16.mxu0 %v1484
        %2246 = vmatpush1.bf16.msra.mxu0 %v1483
        %2247 = vmatprep.subr.bf16.mxu0 %v1502
        %2248 = vmatpush1.bf16.msra.mxu0 %v1501
        %2249 = vmatprep.subr.bf16.mxu0 %v1520
        %2250 = vmatpush1.bf16.msra.mxu0 %v1519
        %2251 = vmatprep.subr.bf16.mxu0 %v1538
        %2252 = vmatpush1.bf16.msra.mxu0 %v1537
        %2253 = vmatprep.subr.bf16.mxu0 %v1556
        %2254 = vmatpush1.bf16.msra.mxu0 %v1555
        %2255 = vmatprep.subr.bf16.mxu0 %v1574
        %2256 = vmatpush1.bf16.msra.mxu0 %v1573
        %2257 = vmatprep.subr.bf16.mxu0 %v1592
        %2258 = vmatpush1.bf16.msra.mxu0 %v1591
        %2259 = vmatprep.subr.bf16.mxu0 %v1610
        %2260 = vmatpush1.bf16.msra.mxu0 %v1609
        %2261 = vmatprep.subr.bf16.mxu0 %v1628
        %2262 = vmatpush1.bf16.msra.mxu0 %v1627
        %2263 = vmatprep.subr.bf16.mxu0 %v1646
        %2264 = vmatpush1.bf16.msra.mxu0 %v1645
        %2265 = vmatprep.subr.bf16.mxu0 %v1664
        %2266 = vmatpush1.bf16.msra.mxu0 %v1663
        %2267 = vmatprep.subr.bf16.mxu0 %v1682
        %2268 = vmatpush1.bf16.msra.mxu0 %v1681
        %2269 = vmatprep.subr.bf16.mxu0 %v1700
        %2270 = vmatpush1.bf16.msra.mxu0 %v1699
        %2271 = vmatprep.mubr.bf16.mxu0 %v550
        %2272 = vmatmul.mubr.bf16.gmra.mrb[0].mxu0 %v549
        %v2273 = vpop.f32.mrb[0].mxu0
        %v2274 = vadd.f32 0.0, %v2273
        %v2275 = vpop.f32.mrb[0].mxu0
        %v2276 = vadd.f32 0.0, %v2275
        %v2277 = vpop.f32.mrb[0].mxu0
        %v2278 = vpop.f32.mrb[0].mxu0
        %2279 = vdwg.mxu0
        %2280 = vmatprep.subr.bf16.mxu0 %v1432
        %2281 = vmatpush1.bf16.msra.mxu0 %v1431
        %2282 = vmatprep.subr.bf16.mxu0 %v1450
        %2283 = vmatpush1.bf16.msra.mxu0 %v1449
        %2284 = vmatprep.subr.bf16.mxu0 %v1468
        %2285 = vmatpush1.bf16.msra.mxu0 %v1467
        %2286 = vmatprep.subr.bf16.mxu0 %v1486
        %2287 = vmatpush1.bf16.msra.mxu0 %v1485
        %2288 = vmatprep.subr.bf16.mxu0 %v1504
        %2289 = vmatpush1.bf16.msra.mxu0 %v1503
        %2290 = vmatprep.subr.bf16.mxu0 %v1522
        %2291 = vmatpush1.bf16.msra.mxu0 %v1521
        %2292 = vmatprep.subr.bf16.mxu0 %v1540
        %2293 = vmatpush1.bf16.msra.mxu0 %v1539
        %2294 = vmatprep.subr.bf16.mxu0 %v1558
        %2295 = vmatpush1.bf16.msra.mxu0 %v1557
        %2296 = vmatprep.subr.bf16.mxu0 %v1576
        %2297 = vmatpush1.bf16.msra.mxu0 %v1575
        %2298 = vmatprep.subr.bf16.mxu0 %v1594
        %2299 = vmatpush1.bf16.msra.mxu0 %v1593
        %2300 = vmatprep.subr.bf16.mxu0 %v1612
        %2301 = vmatpush1.bf16.msra.mxu0 %v1611
        %2302 = vmatprep.subr.bf16.mxu0 %v1630
        %2303 = vmatpush1.bf16.msra.mxu0 %v1629
        %2304 = vmatprep.subr.bf16.mxu0 %v1648
        %2305 = vmatpush1.bf16.msra.mxu0 %v1647
        %2306 = vmatprep.subr.bf16.mxu0 %v1666
        %2307 = vmatpush1.bf16.msra.mxu0 %v1665
        %2308 = vmatprep.subr.bf16.mxu0 %v1684
        %2309 = vmatpush1.bf16.msra.mxu0 %v1683
        %2310 = vmatprep.subr.bf16.mxu0 %v1702
        %2311 = vmatpush1.bf16.msra.mxu0 %v1701
        %2312 = vmatprep.mubr.bf16.mxu0 %v550
        %2313 = vmatmul.mubr.bf16.gmra.mrb[0].mxu0 %v549
        %v2314 = vpop.f32.mrb[0].mxu0
        %v2315 = vadd.f32 0.0, %v2314
        %v2316 = vpop.f32.mrb[0].mxu0
        %v2317 = vadd.f32 0.0, %v2316
        %v2318 = vpop.f32.mrb[0].mxu0
        %v2319 = vpop.f32.mrb[0].mxu0
        %2320 = vdwg.mxu0
        %2321 = vmatprep.subr.bf16.mxu0 %v1434
        %2322 = vmatpush1.bf16.msra.mxu0 %v1433
        %2323 = vmatprep.subr.bf16.mxu0 %v1452
        %2324 = vmatpush1.bf16.msra.mxu0 %v1451
        %2325 = vmatprep.subr.bf16.mxu0 %v1470
        %2326 = vmatpush1.bf16.msra.mxu0 %v1469
        %2327 = vmatprep.subr.bf16.mxu0 %v1488
        %2328 = vmatpush1.bf16.msra.mxu0 %v1487
        %2329 = vmatprep.subr.bf16.mxu0 %v1506
        %2330 = vmatpush1.bf16.msra.mxu0 %v1505
        %2331 = vmatprep.subr.bf16.mxu0 %v1524
        %2332 = vmatpush1.bf16.msra.mxu0 %v1523
        %2333 = vmatprep.subr.bf16.mxu0 %v1542
        %2334 = vmatpush1.bf16.msra.mxu0 %v1541
        %2335 = vmatprep.subr.bf16.mxu0 %v1560
        %2336 = vmatpush1.bf16.msra.mxu0 %v1559
        %2337 = vmatprep.subr.bf16.mxu0 %v1578
        %2338 = vmatpush1.bf16.msra.mxu0 %v1577
        %2339 = vmatprep.subr.bf16.mxu0 %v1596
        %2340 = vmatpush1.bf16.msra.mxu0 %v1595
        %2341 = vmatprep.subr.bf16.mxu0 %v1614
        %2342 = vmatpush1.bf16.msra.mxu0 %v1613
        %2343 = vmatprep.subr.bf16.mxu0 %v1632
        %2344 = vmatpush1.bf16.msra.mxu0 %v1631
        %2345 = vmatprep.subr.bf16.mxu0 %v1650
        %2346 = vmatpush1.bf16.msra.mxu0 %v1649
        %2347 = vmatprep.subr.bf16.mxu0 %v1668
        %2348 = vmatpush1.bf16.msra.mxu0 %v1667
        %2349 = vmatprep.subr.bf16.mxu0 %v1686
        %2350 = vmatpush1.bf16.msra.mxu0 %v1685
        %2351 = vmatprep.subr.bf16.mxu0 %v1704
        %2352 = vmatpush1.bf16.msra.mxu0 %v1703
        %2353 = vmatprep.mubr.bf16.mxu0 %v550
        %2354 = vmatmul.mubr.bf16.gmra.mrb[0].mxu0 %v549
        %v2355 = vpop.f32.mrb[0].mxu0
        %v2356 = vadd.f32 0.0, %v2355
        %v2357 = vpop.f32.mrb[0].mxu0
        %v2358 = vadd.f32 0.0, %v2357
        %v2359 = vpop.f32.mrb[0].mxu0
        %v2360 = vpop.f32.mrb[0].mxu0
        %2361 = vdwg.mxu0
        %v2362 = vmul.f32 %v2028, 0.0625
        %v2363 = vmul.f32 %v2030, 0.0625
        %v2364 = vpack.c.bf16 %v2362, %v2362
        %v2365 = vpack.c.bf16 %v2363, %v2363
        %v2366 = vpack.c.bf16 %v2069, %v2069
        %v2367 = vpack.c.bf16 %v2071, %v2071
        %v2368 = vpack.c.bf16 %v2110, %v2110
        %v2369 = vpack.c.bf16 %v2112, %v2112
        %2370 = vmatprep.subr.bf16.mxu0 %v2367
        %2371 = vmatpush1.bf16.xpose.msra.mxu0 %v2366
        %2372 = vmatprep.subr.bf16.mxu0 0
        %2373 = vmatpush1.bf16.xpose.msra.mxu0 0
        %2374 = vmatprep.subr.bf16.mxu0 0
        %2375 = vmatpush1.bf16.xpose.msra.mxu0 0
        %2376 = vmatprep.subr.bf16.mxu0 0
        %2377 = vmatpush1.bf16.xpose.msra.mxu0 0
        %2378 = vmatprep.subr.bf16.mxu0 0
        %2379 = vmatpush1.bf16.xpose.msra.mxu0 0
        %2380 = vmatprep.subr.bf16.mxu0 0
        %2381 = vmatpush1.bf16.xpose.msra.mxu0 0
        %2382 = vmatprep.subr.bf16.mxu0 0
        %2383 = vmatpush1.bf16.xpose.msra.mxu0 0
        %2384 = vmatprep.subr.bf16.mxu0 0
        %2385 = vmatpush1.bf16.xpose.msra.mxu0 0
        %2386 = vmatprep.subr.bf16.mxu0 0
        %2387 = vmatpush1.bf16.xpose.msra.mxu0 0
        %2388 = vmatprep.subr.bf16.mxu0 0
        %2389 = vmatpush1.bf16.xpose.msra.mxu0 0
        %2390 = vmatprep.subr.bf16.mxu0 0
        %2391 = vmatpush1.bf16.xpose.msra.mxu0 0
        %2392 = vmatprep.subr.bf16.mxu0 0
        %2393 = vmatpush1.bf16.xpose.msra.mxu0 0
        %2394 = vmatprep.subr.bf16.mxu0 0
        %2395 = vmatpush1.bf16.xpose.msra.mxu0 0
        %2396 = vmatprep.subr.bf16.mxu0 0
        %2397 = vmatpush1.bf16.xpose.msra.mxu0 0
        %2398 = vmatprep.subr.bf16.mxu0 0
        %2399 = vmatpush1.bf16.xpose.msra.mxu0 0
        %2400 = vmatprep.subr.bf16.mxu0 0
        %2401 = vmatpush1.bf16.xpose.msra.mxu0 0
        %2402 = vmatprep.mubr.bf16.mxu0 %v2365
        %2403 = vmatmul.mubr.bf16.gmra.mrb[0].mxu0 %v2364
        %v2404 = vpop.f32.mrb[0].mxu0
        %v2405 = vadd.f32 0.0, %v2404
        %v2406 = vpop.f32.mrb[0].mxu0
        %v2407 = vpop.f32.mrb[0].mxu0
        %v2408 = vpop.f32.mrb[0].mxu0
        %2409 = vdwg.mxu0
        %vm2410 = vcmask 64512
        %v2411 = vsel %vm2410, %v2405, -inf
        %v2412 = vrot.slane %v2411, 4
        %v2413 = vmax.f32 %v2411, %v2412
        %v2414 = vrot.slane %v2413, 2
        %v2415 = vmax.f32 %v2413, %v2414
        %v2416 = vrot.slane %v2415, 1
        %v2417 = vmax.f32 %v2415, %v2416
        %v2418 = vsub.f32 %v2405, %v2417
        %v2419 = vmul.f32 %v2418, 1.442695
        %v2420 = vpow.pop %v2419
        %v2421 = vsel %vm2410, %v2420, 0.0
        %v2422 = vrot.slane %v2421, 4
        %v2423 = vadd.f32 %v2421, %v2422
        %v2424 = vrot.slane %v2423, 2
        %v2425 = vadd.f32 %v2423, %v2424
        %v2426 = vrot.slane %v2425, 1
        %v2427 = vadd.f32 %v2425, %v2426
        %v2428 = vrcp.pop %v2427
        %v2429 = vmul.f32 %v2420, %v2428
        %v2430 = vpack.c.bf16 %v2429, %v2429
        %v2431 = vmul.f32 %v2151, 0.0625
        %v2432 = vmul.f32 %v2153, 0.0625
        %v2433 = vpack.c.bf16 %v2431, %v2431
        %v2434 = vpack.c.bf16 %v2432, %v2432
        %v2435 = vpack.c.bf16 %v2192, %v2192
        %v2436 = vpack.c.bf16 %v2194, %v2194
        %v2437 = vpack.c.bf16 %v2233, %v2233
        %v2438 = vpack.c.bf16 %v2235, %v2235
        %2439 = vmatprep.subr.bf16.mxu0 %v2436
        %2440 = vmatpush1.bf16.xpose.msra.mxu0 %v2435
        %2441 = vmatprep.subr.bf16.mxu0 0
        %2442 = vmatpush1.bf16.xpose.msra.mxu0 0
        %2443 = vmatprep.subr.bf16.mxu0 0
        %2444 = vmatpush1.bf16.xpose.msra.mxu0 0
        %2445 = vmatprep.subr.bf16.mxu0 0
        %2446 = vmatpush1.bf16.xpose.msra.mxu0 0
        %2447 = vmatprep.subr.bf16.mxu0 0
        %2448 = vmatpush1.bf16.xpose.msra.mxu0 0
        %2449 = vmatprep.subr.bf16.mxu0 0
        %2450 = vmatpush1.bf16.xpose.msra.mxu0 0
        %2451 = vmatprep.subr.bf16.mxu0 0
        %2452 = vmatpush1.bf16.xpose.msra.mxu0 0
        %2453 = vmatprep.subr.bf16.mxu0 0
        %2454 = vmatpush1.bf16.xpose.msra.mxu0 0
        %2455 = vmatprep.subr.bf16.mxu0 0
        %2456 = vmatpush1.bf16.xpose.msra.mxu0 0
        %2457 = vmatprep.subr.bf16.mxu0 0
        %2458 = vmatpush1.bf16.xpose.msra.mxu0 0
        %2459 = vmatprep.subr.bf16.mxu0 0
        %2460 = vmatpush1.bf16.xpose.msra.mxu0 0
        %2461 = vmatprep.subr.bf16.mxu0 0
        %2462 = vmatpush1.bf16.xpose.msra.mxu0 0
        %2463 = vmatprep.subr.bf16.mxu0 0
        %2464 = vmatpush1.bf16.xpose.msra.mxu0 0
        %2465 = vmatprep.subr.bf16.mxu0 0
        %2466 = vmatpush1.bf16.xpose.msra.mxu0 0
        %2467 = vmatprep.subr.bf16.mxu0 0
        %2468 = vmatpush1.bf16.xpose.msra.mxu0 0
        %2469 = vmatprep.subr.bf16.mxu0 0
        %2470 = vmatpush1.bf16.xpose.msra.mxu0 0
        %2471 = vmatprep.mubr.bf16.mxu0 %v2434
        %2472 = vmatmul.mubr.bf16.gmra.mrb[0].mxu0 %v2433
        %v2473 = vpop.f32.mrb[0].mxu0
        %v2474 = vadd.f32 0.0, %v2473
        %v2475 = vpop.f32.mrb[0].mxu0
        %v2476 = vpop.f32.mrb[0].mxu0
        %v2477 = vpop.f32.mrb[0].mxu0
        %2478 = vdwg.mxu0
        %v2479 = vsel %vm2410, %v2474, -inf
        %v2480 = vrot.slane %v2479, 4
        %v2481 = vmax.f32 %v2479, %v2480
        %v2482 = vrot.slane %v2481, 2
        %v2483 = vmax.f32 %v2481, %v2482
        %v2484 = vrot.slane %v2483, 1
        %v2485 = vmax.f32 %v2483, %v2484
        %v2486 = vsub.f32 %v2474, %v2485
        %v2487 = vmul.f32 %v2486, 1.442695
        %v2488 = vpow.pop %v2487
        %v2489 = vsel %vm2410, %v2488, 0.0
        %v2490 = vrot.slane %v2489, 4
        %v2491 = vadd.f32 %v2489, %v2490
        %v2492 = vrot.slane %v2491, 2
        %v2493 = vadd.f32 %v2491, %v2492
        %v2494 = vrot.slane %v2493, 1
        %v2495 = vadd.f32 %v2493, %v2494
        %v2496 = vrcp.pop %v2495
        %v2497 = vmul.f32 %v2488, %v2496
        %v2498 = vpack.c.bf16 %v2497, %v2497
        %v2500 = vsel %vm2410, %v2498, 0
        %vm2502 = vcmask 1043456
        %v2504 = vsel %vm2502, %v2437, 0
        %v2507 = vsel %vm2502, %v2438, 0
        %2509 = vmatprep.subr.bf16.mxu0 %v2507
        %2510 = vmatpush1.bf16.msra.mxu0 %v2504
        %2511 = vmatprep.subr.bf16.mxu0 0
        %2512 = vmatpush1.bf16.msra.mxu0 0
        %2513 = vmatprep.subr.bf16.mxu0 0
        %2514 = vmatpush1.bf16.msra.mxu0 0
        %2515 = vmatprep.subr.bf16.mxu0 0
        %2516 = vmatpush1.bf16.msra.mxu0 0
        %2517 = vmatprep.subr.bf16.mxu0 0
        %2518 = vmatpush1.bf16.msra.mxu0 0
        %2519 = vmatprep.subr.bf16.mxu0 0
        %2520 = vmatpush1.bf16.msra.mxu0 0
        %2521 = vmatprep.subr.bf16.mxu0 0
        %2522 = vmatpush1.bf16.msra.mxu0 0
        %2523 = vmatprep.subr.bf16.mxu0 0
        %2524 = vmatpush1.bf16.msra.mxu0 0
        %2525 = vmatprep.subr.bf16.mxu0 0
        %2526 = vmatpush1.bf16.msra.mxu0 0
        %2527 = vmatprep.subr.bf16.mxu0 0
        %2528 = vmatpush1.bf16.msra.mxu0 0
        %2529 = vmatprep.subr.bf16.mxu0 0
        %2530 = vmatpush1.bf16.msra.mxu0 0
        %2531 = vmatprep.subr.bf16.mxu0 0
        %2532 = vmatpush1.bf16.msra.mxu0 0
        %2533 = vmatprep.subr.bf16.mxu0 0
        %2534 = vmatpush1.bf16.msra.mxu0 0
        %2535 = vmatprep.subr.bf16.mxu0 0
        %2536 = vmatpush1.bf16.msra.mxu0 0
        %2537 = vmatprep.subr.bf16.mxu0 0
        %2538 = vmatpush1.bf16.msra.mxu0 0
        %2539 = vmatprep.subr.bf16.mxu0 0
        %2540 = vmatpush1.bf16.msra.mxu0 0
        %2541 = vmatprep.mubr.bf16.mxu0 0
        %2542 = vmatmul.mubr.bf16.gmra.mrb[0].mxu0 %v2500
        %v2543 = vpop.f32.mrb[0].mxu0
        %v2544 = vadd.f32 0.0, %v2543
        %v2545 = vpop.f32.mrb[0].mxu0
        %v2546 = vadd.f32 0.0, %v2545
        %v2547 = vpop.f32.mrb[0].mxu0
        %v2548 = vpop.f32.mrb[0].mxu0
        %2549 = vdwg.mxu0
        %v2551 = vsel %vm2410, %v2430, 0
        %v2554 = vsel %vm2502, %v2368, 0
        %v2557 = vsel %vm2502, %v2369, 0
        %2559 = vmatprep.subr.bf16.mxu0 %v2557
        %2560 = vmatpush1.bf16.msra.mxu0 %v2554
        %2561 = vmatprep.subr.bf16.mxu0 0
        %2562 = vmatpush1.bf16.msra.mxu0 0
        %2563 = vmatprep.subr.bf16.mxu0 0
        %2564 = vmatpush1.bf16.msra.mxu0 0
        %2565 = vmatprep.subr.bf16.mxu0 0
        %2566 = vmatpush1.bf16.msra.mxu0 0
        %2567 = vmatprep.subr.bf16.mxu0 0
        %2568 = vmatpush1.bf16.msra.mxu0 0
        %2569 = vmatprep.subr.bf16.mxu0 0
        %2570 = vmatpush1.bf16.msra.mxu0 0
        %2571 = vmatprep.subr.bf16.mxu0 0
        %2572 = vmatpush1.bf16.msra.mxu0 0
        %2573 = vmatprep.subr.bf16.mxu0 0
        %2574 = vmatpush1.bf16.msra.mxu0 0
        %2575 = vmatprep.subr.bf16.mxu0 0
        %2576 = vmatpush1.bf16.msra.mxu0 0
        %2577 = vmatprep.subr.bf16.mxu0 0
        %2578 = vmatpush1.bf16.msra.mxu0 0
        %2579 = vmatprep.subr.bf16.mxu0 0
        %2580 = vmatpush1.bf16.msra.mxu0 0
        %2581 = vmatprep.subr.bf16.mxu0 0
        %2582 = vmatpush1.bf16.msra.mxu0 0
        %2583 = vmatprep.subr.bf16.mxu0 0
        %2584 = vmatpush1.bf16.msra.mxu0 0
        %2585 = vmatprep.subr.bf16.mxu0 0
        %2586 = vmatpush1.bf16.msra.mxu0 0
        %2587 = vmatprep.subr.bf16.mxu0 0
        %2588 = vmatpush1.bf16.msra.mxu0 0
        %2589 = vmatprep.subr.bf16.mxu0 0
        %2590 = vmatpush1.bf16.msra.mxu0 0
        %2591 = vmatprep.mubr.bf16.mxu0 0
        %2592 = vmatmul.mubr.bf16.gmra.mrb[0].mxu0 %v2551
        %v2593 = vpop.f32.mrb[0].mxu0
        %v2594 = vadd.f32 %v2544, %v2593
        %v2595 = vpop.f32.mrb[0].mxu0
        %v2596 = vadd.f32 %v2546, %v2595
        %v2597 = vpop.f32.mrb[0].mxu0
        %v2598 = vpop.f32.mrb[0].mxu0
        %2599 = vdwg.mxu0
        %v2600 = vmul.f32 %v2274, 0.0625
        %v2601 = vmul.f32 %v2276, 0.0625
        %v2602 = vpack.c.bf16 %v2600, %v2600
        %v2603 = vpack.c.bf16 %v2601, %v2601
        %v2604 = vpack.c.bf16 %v2315, %v2315
        %v2605 = vpack.c.bf16 %v2317, %v2317
        %v2606 = vpack.c.bf16 %v2356, %v2356
        %v2607 = vpack.c.bf16 %v2358, %v2358
        %2608 = vmatprep.subr.bf16.mxu0 %v2605
        %2609 = vmatpush1.bf16.xpose.msra.mxu0 %v2604
        %2610 = vmatprep.subr.bf16.mxu0 0
        %2611 = vmatpush1.bf16.xpose.msra.mxu0 0
        %2612 = vmatprep.subr.bf16.mxu0 0
        %2613 = vmatpush1.bf16.xpose.msra.mxu0 0
        %2614 = vmatprep.subr.bf16.mxu0 0
        %2615 = vmatpush1.bf16.xpose.msra.mxu0 0
        %2616 = vmatprep.subr.bf16.mxu0 0
        %2617 = vmatpush1.bf16.xpose.msra.mxu0 0
        %2618 = vmatprep.subr.bf16.mxu0 0
        %2619 = vmatpush1.bf16.xpose.msra.mxu0 0
        %2620 = vmatprep.subr.bf16.mxu0 0
        %2621 = vmatpush1.bf16.xpose.msra.mxu0 0
        %2622 = vmatprep.subr.bf16.mxu0 0
        %2623 = vmatpush1.bf16.xpose.msra.mxu0 0
        %2624 = vmatprep.subr.bf16.mxu0 0
        %2625 = vmatpush1.bf16.xpose.msra.mxu0 0
        %2626 = vmatprep.subr.bf16.mxu0 0
        %2627 = vmatpush1.bf16.xpose.msra.mxu0 0
        %2628 = vmatprep.subr.bf16.mxu0 0
        %2629 = vmatpush1.bf16.xpose.msra.mxu0 0
        %2630 = vmatprep.subr.bf16.mxu0 0
        %2631 = vmatpush1.bf16.xpose.msra.mxu0 0
        %2632 = vmatprep.subr.bf16.mxu0 0
        %2633 = vmatpush1.bf16.xpose.msra.mxu0 0
        %2634 = vmatprep.subr.bf16.mxu0 0
        %2635 = vmatpush1.bf16.xpose.msra.mxu0 0
        %2636 = vmatprep.subr.bf16.mxu0 0
        %2637 = vmatpush1.bf16.xpose.msra.mxu0 0
        %2638 = vmatprep.subr.bf16.mxu0 0
        %2639 = vmatpush1.bf16.xpose.msra.mxu0 0
        %2640 = vmatprep.mubr.bf16.mxu0 %v2603
        %2641 = vmatmul.mubr.bf16.gmra.mrb[0].mxu0 %v2602
        %v2642 = vpop.f32.mrb[0].mxu0
        %v2643 = vadd.f32 0.0, %v2642
        %v2644 = vpop.f32.mrb[0].mxu0
        %v2645 = vpop.f32.mrb[0].mxu0
        %v2646 = vpop.f32.mrb[0].mxu0
        %2647 = vdwg.mxu0
        %v2648 = vsel %vm2410, %v2643, -inf
        %v2649 = vrot.slane %v2648, 4
        %v2650 = vmax.f32 %v2648, %v2649
        %v2651 = vrot.slane %v2650, 2
        %v2652 = vmax.f32 %v2650, %v2651
        %v2653 = vrot.slane %v2652, 1
        %v2654 = vmax.f32 %v2652, %v2653
        %v2655 = vsub.f32 %v2643, %v2654
        %v2656 = vmul.f32 %v2655, 1.442695
        %v2657 = vpow.pop %v2656
        %v2658 = vsel %vm2410, %v2657, 0.0
        %v2659 = vrot.slane %v2658, 4
        %v2660 = vadd.f32 %v2658, %v2659
        %v2661 = vrot.slane %v2660, 2
        %v2662 = vadd.f32 %v2660, %v2661
        %v2663 = vrot.slane %v2662, 1
        %v2664 = vadd.f32 %v2662, %v2663
        %v2665 = vrcp.pop %v2664
        %v2666 = vmul.f32 %v2657, %v2665
        %v2667 = vpack.c.bf16 %v2666, %v2666
        %v2669 = vsel %vm2410, %v2667, 0
        %v2672 = vsel %vm2502, %v2606, 0
        %v2675 = vsel %vm2502, %v2607, 0
        %2677 = vmatprep.subr.bf16.mxu0 %v2675
        %2678 = vmatpush1.bf16.msra.mxu0 %v2672
        %2679 = vmatprep.subr.bf16.mxu0 0
        %2680 = vmatpush1.bf16.msra.mxu0 0
        %2681 = vmatprep.subr.bf16.mxu0 0
        %2682 = vmatpush1.bf16.msra.mxu0 0
        %2683 = vmatprep.subr.bf16.mxu0 0
        %2684 = vmatpush1.bf16.msra.mxu0 0
        %2685 = vmatprep.subr.bf16.mxu0 0
        %2686 = vmatpush1.bf16.msra.mxu0 0
        %2687 = vmatprep.subr.bf16.mxu0 0
        %2688 = vmatpush1.bf16.msra.mxu0 0
        %2689 = vmatprep.subr.bf16.mxu0 0
        %2690 = vmatpush1.bf16.msra.mxu0 0
        %2691 = vmatprep.subr.bf16.mxu0 0
        %2692 = vmatpush1.bf16.msra.mxu0 0
        %2693 = vmatprep.subr.bf16.mxu0 0
        %2694 = vmatpush1.bf16.msra.mxu0 0
        %2695 = vmatprep.subr.bf16.mxu0 0
        %2696 = vmatpush1.bf16.msra.mxu0 0
        %2697 = vmatprep.subr.bf16.mxu0 0
        %2698 = vmatpush1.bf16.msra.mxu0 0
        %2699 = vmatprep.subr.bf16.mxu0 0
        %2700 = vmatpush1.bf16.msra.mxu0 0
        %2701 = vmatprep.subr.bf16.mxu0 0
        %2702 = vmatpush1.bf16.msra.mxu0 0
        %2703 = vmatprep.subr.bf16.mxu0 0
        %2704 = vmatpush1.bf16.msra.mxu0 0
        %2705 = vmatprep.subr.bf16.mxu0 0
        %2706 = vmatpush1.bf16.msra.mxu0 0
        %2707 = vmatprep.subr.bf16.mxu0 0
        %2708 = vmatpush1.bf16.msra.mxu0 0
        %2709 = vmatprep.mubr.bf16.mxu0 0
        %2710 = vmatmul.mubr.bf16.gmra.mrb[0].mxu0 %v2669
        %v2711 = vpop.f32.mrb[0].mxu0
        %v2712 = vadd.f32 0.0, %v2711
        %v2713 = vpop.f32.mrb[0].mxu0
        %v2714 = vadd.f32 0.0, %v2713
        %v2715 = vpop.f32.mrb[0].mxu0
        %v2716 = vpop.f32.mrb[0].mxu0
        %2717 = vdwg.mxu0
        %v2718 = vadd.f32 %v2594, %v2712
        %v2719 = vadd.f32 %v2596, %v2714
        %v2720 = vmul.f32 %v2718, 0.33333334
        %v2721 = vmul.f32 %v2719, 0.33333334
        %v2722 = vpack.c.bf16 %v2720, %v2720
        %v2723 = vpack.c.bf16 %v2721, %v2721
        %v2724 = vld [vmem:[#allocation7] sm:$0xff]
        %v2725 = vld [vmem:[#allocation7 + $0x8] sm:$0xff]
        %v2726 = vld [vmem:[#allocation7 + $0x10] sm:$0xff]
        %v2727 = vld [vmem:[#allocation7 + $0x18] sm:$0xff]
        %v2728 = vld [vmem:[#allocation7 + $0x20] sm:$0xff]
        %v2729 = vld [vmem:[#allocation7 + $0x28] sm:$0xff]
        %v2730 = vld [vmem:[#allocation7 + $0x30] sm:$0xff]
        %v2731 = vld [vmem:[#allocation7 + $0x38] sm:$0xff]
        %v2732 = vld [vmem:[#allocation7 + $0x40] sm:$0xff]
        %v2733 = vld [vmem:[#allocation7 + $0x48] sm:$0xff]
        %v2734 = vld [vmem:[#allocation7 + $0x50] sm:$0xff]
        %v2735 = vld [vmem:[#allocation7 + $0x58] sm:$0xff]
        %v2736 = vld [vmem:[#allocation7 + $0x60] sm:$0xff]
        %v2737 = vld [vmem:[#allocation7 + $0x68] sm:$0xff]
        %v2738 = vld [vmem:[#allocation7 + $0x70] sm:$0xff]
        %v2739 = vld [vmem:[#allocation7 + $0x78] sm:$0xff]
        %v2740 = vld [vmem:[#allocation7 + $0x80] sm:$0xff]
        %v2741 = vld [vmem:[#allocation7 + $0x88] sm:$0xff]
        %v2742 = vld [vmem:[#allocation7 + $0x90] sm:$0xff]
        %v2743 = vld [vmem:[#allocation7 + $0x98] sm:$0xff]
        %v2744 = vld [vmem:[#allocation7 + $0xa0] sm:$0xff]
        %v2745 = vld [vmem:[#allocation7 + $0xa8] sm:$0xff]
        %v2746 = vld [vmem:[#allocation7 + $0xb0] sm:$0xff]
        %v2747 = vld [vmem:[#allocation7 + $0xb8] sm:$0xff]
        %v2748 = vld [vmem:[#allocation7 + $0xc0] sm:$0xff]
        %v2749 = vld [vmem:[#allocation7 + $0xc8] sm:$0xff]
        %v2750 = vld [vmem:[#allocation7 + $0xd0] sm:$0xff]
        %v2751 = vld [vmem:[#allocation7 + $0xd8] sm:$0xff]
        %v2752 = vld [vmem:[#allocation7 + $0xe0] sm:$0xff]
        %v2753 = vld [vmem:[#allocation7 + $0xe8] sm:$0xff]
        %v2754 = vld [vmem:[#allocation7 + $0xf0] sm:$0xff]
        %v2755 = vld [vmem:[#allocation7 + $0xf8] sm:$0xff]
        %v2756 = vld [vmem:[#allocation8] sm:$0x3]
        %v2758 = vlaneseq
        %v2759 = vshrl.u32 %v2758, 7
        %v2760 = vsub.s32 0, %v2759
        %v2761 = vrot.slane %v2756, %v2760
        %v2762 = vlaneseq
        %v2763 = vshrl.u32 %v2762, 7
        %v2764 = vsub.s32 1, %v2763
        %v2765 = vrot.slane %v2756, %v2764
        %v2800 = vunpack.c.l.b16 %v2724
        %v2801 = vunpack.c.h.b16 %v2724
        %v2802 = vunpack.c.l.b16 %v2725
        %v2803 = vunpack.c.h.b16 %v2725
        %v2804 = vunpack.c.l.b16 %v2726
        %v2805 = vunpack.c.h.b16 %v2726
        %v2806 = vunpack.c.l.b16 %v2727
        %v2807 = vunpack.c.h.b16 %v2727
        %v2808 = vunpack.c.l.b16 %v2728
        %v2809 = vunpack.c.h.b16 %v2728
        %v2810 = vunpack.c.l.b16 %v2729
        %v2811 = vunpack.c.h.b16 %v2729
        %v2812 = vunpack.c.l.b16 %v2730
        %v2813 = vunpack.c.h.b16 %v2730
        %v2814 = vunpack.c.l.b16 %v2731
        %v2815 = vunpack.c.h.b16 %v2731
        %v2816 = vunpack.c.l.b16 %v2732
        %v2817 = vunpack.c.h.b16 %v2732
        %v2818 = vunpack.c.l.b16 %v2733
        %v2819 = vunpack.c.h.b16 %v2733
        %v2820 = vunpack.c.l.b16 %v2734
        %v2821 = vunpack.c.h.b16 %v2734
        %v2822 = vunpack.c.l.b16 %v2735
        %v2823 = vunpack.c.h.b16 %v2735
        %v2824 = vunpack.c.l.b16 %v2736
        %v2825 = vunpack.c.h.b16 %v2736
        %v2826 = vunpack.c.l.b16 %v2737
        %v2827 = vunpack.c.h.b16 %v2737
        %v2828 = vunpack.c.l.b16 %v2738
        %v2829 = vunpack.c.h.b16 %v2738
        %v2830 = vunpack.c.l.b16 %v2739
        %v2831 = vunpack.c.h.b16 %v2739
        %v2832 = vunpack.c.l.b16 %v2740
        %v2833 = vunpack.c.h.b16 %v2740
        %v2834 = vunpack.c.l.b16 %v2741
        %v2835 = vunpack.c.h.b16 %v2741
        %v2836 = vunpack.c.l.b16 %v2742
        %v2837 = vunpack.c.h.b16 %v2742
        %v2838 = vunpack.c.l.b16 %v2743
        %v2839 = vunpack.c.h.b16 %v2743
        %v2840 = vunpack.c.l.b16 %v2744
        %v2841 = vunpack.c.h.b16 %v2744
        %v2842 = vunpack.c.l.b16 %v2745
        %v2843 = vunpack.c.h.b16 %v2745
        %v2844 = vunpack.c.l.b16 %v2746
        %v2845 = vunpack.c.h.b16 %v2746
        %v2846 = vunpack.c.l.b16 %v2747
        %v2847 = vunpack.c.h.b16 %v2747
        %v2848 = vunpack.c.l.b16 %v2748
        %v2849 = vunpack.c.h.b16 %v2748
        %v2850 = vunpack.c.l.b16 %v2749
        %v2851 = vunpack.c.h.b16 %v2749
        %v2852 = vunpack.c.l.b16 %v2750
        %v2853 = vunpack.c.h.b16 %v2750
        %v2854 = vunpack.c.l.b16 %v2751
        %v2855 = vunpack.c.h.b16 %v2751
        %v2856 = vunpack.c.l.b16 %v2752
        %v2857 = vunpack.c.h.b16 %v2752
        %v2858 = vunpack.c.l.b16 %v2753
        %v2859 = vunpack.c.h.b16 %v2753
        %v2860 = vunpack.c.l.b16 %v2754
        %v2861 = vunpack.c.h.b16 %v2754
        %v2862 = vunpack.c.l.b16 %v2755
        %v2863 = vunpack.c.h.b16 %v2755
        %v2864 = vpack.c.b16 %v2802, %v2800
        %v2865 = vpack.c.b16 %v2803, %v2801
        %v2866 = vpack.c.b16 %v2806, %v2804
        %v2867 = vpack.c.b16 %v2807, %v2805
        %v2868 = vpack.c.b16 %v2810, %v2808
        %v2869 = vpack.c.b16 %v2811, %v2809
        %v2870 = vpack.c.b16 %v2814, %v2812
        %v2871 = vpack.c.b16 %v2815, %v2813
        %v2872 = vpack.c.b16 %v2818, %v2816
        %v2873 = vpack.c.b16 %v2819, %v2817
        %v2874 = vpack.c.b16 %v2822, %v2820
        %v2875 = vpack.c.b16 %v2823, %v2821
        %v2876 = vpack.c.b16 %v2826, %v2824
        %v2877 = vpack.c.b16 %v2827, %v2825
        %v2878 = vpack.c.b16 %v2830, %v2828
        %v2879 = vpack.c.b16 %v2831, %v2829
        %v2880 = vpack.c.b16 %v2834, %v2832
        %v2881 = vpack.c.b16 %v2835, %v2833
        %v2882 = vpack.c.b16 %v2838, %v2836
        %v2883 = vpack.c.b16 %v2839, %v2837
        %v2884 = vpack.c.b16 %v2842, %v2840
        %v2885 = vpack.c.b16 %v2843, %v2841
        %v2886 = vpack.c.b16 %v2846, %v2844
        %v2887 = vpack.c.b16 %v2847, %v2845
        %v2888 = vpack.c.b16 %v2850, %v2848
        %v2889 = vpack.c.b16 %v2851, %v2849
        %v2890 = vpack.c.b16 %v2854, %v2852
        %v2891 = vpack.c.b16 %v2855, %v2853
        %v2892 = vpack.c.b16 %v2858, %v2856
        %v2893 = vpack.c.b16 %v2859, %v2857
        %v2894 = vpack.c.b16 %v2862, %v2860
        %v2895 = vpack.c.b16 %v2863, %v2861
        %2928 = vmatprep.subr.bf16.mxu0 %v2865
        %2929 = vmatpush1.bf16.msra.mxu0 %v2864
        %2930 = vmatprep.subr.bf16.mxu0 %v2867
        %2931 = vmatpush1.bf16.msra.mxu0 %v2866
        %2932 = vmatprep.subr.bf16.mxu0 %v2869
        %2933 = vmatpush1.bf16.msra.mxu0 %v2868
        %2934 = vmatprep.subr.bf16.mxu0 %v2871
        %2935 = vmatpush1.bf16.msra.mxu0 %v2870
        %2936 = vmatprep.subr.bf16.mxu0 %v2873
        %2937 = vmatpush1.bf16.msra.mxu0 %v2872
        %2938 = vmatprep.subr.bf16.mxu0 %v2875
        %2939 = vmatpush1.bf16.msra.mxu0 %v2874
        %2940 = vmatprep.subr.bf16.mxu0 %v2877
        %2941 = vmatpush1.bf16.msra.mxu0 %v2876
        %2942 = vmatprep.subr.bf16.mxu0 %v2879
        %2943 = vmatpush1.bf16.msra.mxu0 %v2878
        %2944 = vmatprep.subr.bf16.mxu0 %v2881
        %2945 = vmatpush1.bf16.msra.mxu0 %v2880
        %2946 = vmatprep.subr.bf16.mxu0 %v2883
        %2947 = vmatpush1.bf16.msra.mxu0 %v2882
        %2948 = vmatprep.subr.bf16.mxu0 %v2885
        %2949 = vmatpush1.bf16.msra.mxu0 %v2884
        %2950 = vmatprep.subr.bf16.mxu0 %v2887
        %2951 = vmatpush1.bf16.msra.mxu0 %v2886
        %2952 = vmatprep.subr.bf16.mxu0 %v2889
        %2953 = vmatpush1.bf16.msra.mxu0 %v2888
        %2954 = vmatprep.subr.bf16.mxu0 %v2891
        %2955 = vmatpush1.bf16.msra.mxu0 %v2890
        %2956 = vmatprep.subr.bf16.mxu0 %v2893
        %2957 = vmatpush1.bf16.msra.mxu0 %v2892
        %2958 = vmatprep.subr.bf16.mxu0 %v2895
        %2959 = vmatpush1.bf16.msra.mxu0 %v2894
        %2960 = vmatprep.mubr.bf16.mxu0 %v2723
        %2961 = vmatmul.mubr.bf16.gmra.mrb[0].mxu0 %v2722
        %v2962 = vpop.f32.mrb[0].mxu0
        %v2963 = vadd.f32 %v2761, %v2962
        %v2964 = vpop.f32.mrb[0].mxu0
        %v2965 = vadd.f32 %v2765, %v2964
        %v2966 = vpop.f32.mrb[0].mxu0
        %v2967 = vpop.f32.mrb[0].mxu0
        %2968 = vdwg.mxu0
        %2969 = vst [vmem:[%s255] sm:$0xff] %v2963
        %2970 = vst [vmem:[%s255 + $0x8] sm:$0xff] %v2965
        %s2971 = sand.u32 %s120, 1
        %s2972 = scalar_lea.sflag [#allocation4], %s2971
        %s2973 = sand.u32 %s120, 1
        %s2974 = smul.addr %s2973, 16
        %s2975 = scalar_lea.vmem [#allocation10], %s2974
        // Predicated region
        $region53: #{tpu_custom_call.1} parent=35 // pred_check
          %p2976 = pneg %p130
        $region54: #{tpu_custom_call.1} parent=35 // pred_check_branch
          %2978 = sbr.rel (%p2976) target = $region56
        $region55: #{tpu_custom_call.1} parent=35 // pred_region
          %s2980 = ssub.s32 256, 256
          %2981 = vsyncadd %s2972, %s2980
          %s2982 = smul.addr %s23, 2
          %s2983 = smul.addr %s2982, 128
          %s2984 = scalar_lea.hbm %s4, %s2983
          %s2986 = sshll.u32 %s2975, 4
          %s2987 = int_to_ptr.vmem [resolvable:$true] %s2986
          %2989 = dma.vmem_to_hbm [thread:$0]  %s2987, 256, %s2984, %s2972
        $region56: #{tpu_custom_call.1} parent=35 // pred_fallthru
          _
      $region36: #{tpu_custom_call.1} parent=5 // pred_fallthru
        _
      %p2990 = scmp.le.s32.totalorder 2, %s18
      // Predicated region
      $region57: #{tpu_custom_call.1} parent=5 // pred_check
        %p2991 = pneg %p2990
      $region58: #{tpu_custom_call.1} parent=5 // pred_check_branch
        %2993 = sbr.rel (%p2991) target = $region60
      $region59: #{tpu_custom_call.1} parent=5 // pred_region
        %s2994 = ssub.s32 %s18, 2
        // Predicated region
        $region61: #{tpu_custom_call.1} parent=59 // pred_check
          %p2995 = pneg %p136
        $region62: #{tpu_custom_call.1} parent=59 // pred_check_branch
          %2997 = sbr.rel (%p2995) target = $region64
        $region63: #{tpu_custom_call.1} parent=59 // pred_region
          %s2998 = sand.u32 %s121, 1
          %s2999 = scalar_lea.sflag [#allocation4], %s2998
          %s3000 = sand.u32 %s121, 1
          %s3001 = smul.addr %s3000, 16
          %s3002 = scalar_lea.vmem [#allocation10], %s3001
          %3003 = dma.done %s2999, 256
        $region64: #{tpu_custom_call.1} parent=59 // pred_fallthru
          _
      $region60: #{tpu_custom_call.1} parent=5 // pred_fallthru
        _
    $region6: #{tpu_custom_call.1} parent=1 // loop_footer
      %s22 = sadd.s32 1, %s18
    $region7: #{tpu_custom_call.1} parent=1 // loop_footer_branch
      %17 = sbr.rel target = $region3
    $region8: #{tpu_custom_call.1} parent=1 // loop_exit
      _
    %3004 = vsyncpa [#allocation3], 1
    %s3005 = scalar_lea.sflag [#allocation3], 1
    %3006 = vsyncpa %s3005, 1
    %3007 = vsyncpa [#allocation6], 1
    %3008 = vsyncpa [#allocation9], 1
    %3009 = vsyncpa [#allocation4], 1
    %s3010 = scalar_lea.sflag [#allocation4], 1
    %3011 = vsyncpa %s3010, 1

</llo_original>
